<compile_context>
chip_gen: v6e
topology: v6e:2x2x1
jax: 0.10.0
libtpu: 0.0.40
codegen_flags: <defaults>
</compile_context>

<pallas_src>
import jax
import jax.numpy as jnp
from jax.experimental import pallas as pl
from jax.experimental.pallas import tpu as pltpu

IMG = 28
IN_DIM = IMG * IMG      # 784, fixed by the module (Linear(28*28, h_dim))
H_DIM = 256
Z_DIM = 32
MS_PAD = 128            # lane-dense fused mean|sigma output width
TB_MAX = 1024           # max batch tile (bf16 I/O keeps it inside v5e scoped VMEM)


def _round_up(x, m):
    return ((x + m - 1) // m) * m


def vae_kernel(x_ref, eps_ref, w1_ref, b1_ref, wms_ref, bms_ref,
               wd1_ref, bd1_ref, wd2_ref, bd2_ref, recon_ref, ms_ref, hh_ref):
    # ----- encoder: Flatten -> Linear(784->256) -> ReLU (bf16 MXU, f32 accum) -----
    h = jnp.dot(x_ref[...], w1_ref[...],
                preferred_element_type=jnp.float32) + b1_ref[...]
    h = jnp.maximum(h, 0.0)                                            # (tb, 256) f32

    # ----- fused mean / sigma heads -----
    # mean = Linear(sigmoid(h)); sigma = Linear(relu(h)) == Linear(h) since h is
    # already ReLU'd (the reference's second ReLU is a no-op).  The two heads see
    # DIFFERENT activations, so they fuse as ONE block-diagonal (512, 128) matmul
    # over [sigmoid(h) | h] written into a persistent bf16 scratch (no concat copy).
    # Exact sigmoid here: this feeds mean/sigma (KL path), so no approx reciprocal.
    hh_ref[:, :H_DIM] = (1.0 / (1.0 + jnp.exp(-h))).astype(jnp.bfloat16)
    hh_ref[:, H_DIM:] = h.astype(jnp.bfloat16)
    ms = jnp.dot(hh_ref[...], wms_ref[...],
                 preferred_element_type=jnp.float32) + bms_ref[...]    # (tb, 128) f32
    ms_ref[...] = ms                                                   # lane-dense store

    # ----- reparameterize: z = mean + sigma * eps -----
    z = ms[:, :Z_DIM] + ms[:, Z_DIM:2 * Z_DIM] * eps_ref[...]          # (tb, 32) f32

    # ----- decoder: Linear(32->256) -> ReLU -> Linear(256->784) -> Sigmoid -----
    d1 = jnp.dot(z.astype(jnp.bfloat16), wd1_ref[...],
                 preferred_element_type=jnp.float32) + bd1_ref[...]
    d1 = jnp.maximum(d1, 0.0)                                          # (tb, 256) f32
    d2 = jnp.dot(d1.astype(jnp.bfloat16), wd2_ref[...],
                 preferred_element_type=jnp.float32) + bd2_ref[...]    # (tb, 784) f32
    # recon sigmoid: exp on EUP + approx reciprocal (also EUP slot); bf16 store.
    recon_ref[...] = pl.reciprocal(1.0 + jnp.exp(-d2),
                                   approx=True).astype(jnp.bfloat16)


def _pack_params(params):
    """Fuse / cast the logical (f32, transposed) params into kernel layout."""
    w1, b1, wm, bm, ws, bs, wd1, bd1, wd2, bd2 = params
    w1p = w1.astype(jnp.bfloat16)                               # (784, 256)
    b1p = b1.reshape(1, H_DIM).astype(jnp.float32)
    # fused mean/sigma head: block-diagonal (heads see different inputs),
    # padded to 128 output lanes so the ms store is lane-dense.
    wmsp = jnp.zeros((2 * H_DIM, MS_PAD), jnp.float32)
    wmsp = (wmsp.at[:H_DIM, :Z_DIM].set(wm)
                .at[H_DIM:, Z_DIM:2 * Z_DIM].set(ws)).astype(jnp.bfloat16)
    bmsp = jnp.zeros((1, MS_PAD), jnp.float32)
    bmsp = (bmsp.at[:, :Z_DIM].set(bm.reshape(1, Z_DIM))
                 .at[:, Z_DIM:2 * Z_DIM].set(bs.reshape(1, Z_DIM)))
    wd1p = wd1.astype(jnp.bfloat16)                             # (32, 256)
    bd1p = bd1.reshape(1, H_DIM).astype(jnp.float32)
    wd2p = wd2.astype(jnp.bfloat16)                             # (256, 784)
    bd2p = bd2.reshape(1, IN_DIM).astype(jnp.float32)
    return w1p, b1p, wmsp, bmsp, wd1p, bd1p, wd2p, bd2p


def vae_forward(x_nchw, params, eps):
    """x_nchw: (B, 1, 28, 28) f32.  Returns (recon (B,1,28,28) bf16,
    mean (B,32) f32, sigma (B,32) f32)."""
    B = x_nchw.shape[0]

    # Batch tile: multiple of 16 (bf16 sublane tile), capped at TB_MAX; if the
    # batch would give only one grid step, split it so v7x megacore gets >= 2
    # "parallel" steps.
    tb = min(TB_MAX, _round_up(B, 16))
    if _round_up(B, tb) // tb < 2 and tb >= 32:
        tb = _round_up(tb // 2, 16)
    b_pad = _round_up(B, tb)
    n_blk = b_pad // tb

    # Single fused pass: flatten (free reshape) + bf16 cast + batch-row pad.
    # No feature-dim padding and no post-kernel unpad copy of recon.
    x_b = jnp.pad(x_nchw.reshape(B, IN_DIM).astype(jnp.bfloat16),
                  ((0, b_pad - B), (0, 0)))
    eps_b = jnp.pad(eps.astype(jnp.float32), ((0, b_pad - B), (0, 0)))

    w1p, b1p, wmsp, bmsp, wd1p, bd1p, wd2p, bd2p = _pack_params(params)

    def batch_spec(ncols):
        return pl.BlockSpec((tb, ncols), lambda i: (i, 0))

    def resident_spec(arr):
        # constant index_map -> block stays VMEM-resident across grid steps
        return pl.BlockSpec(arr.shape, lambda i: (0, 0))

    in_specs = [
        batch_spec(IN_DIM),      # x (bf16)
        batch_spec(Z_DIM),       # eps (f32, narrow but tiny)
        resident_spec(w1p), resident_spec(b1p),
        resident_spec(wmsp), resident_spec(bmsp),
        resident_spec(wd1p), resident_spec(bd1p),
        resident_spec(wd2p), resident_spec(bd2p),
    ]
    out_specs = (batch_spec(IN_DIM), batch_spec(MS_PAD))
    out_shapes = (jax.ShapeDtypeStruct((b_pad, IN_DIM), jnp.bfloat16),
                  jax.ShapeDtypeStruct((b_pad, MS_PAD), jnp.float32))

    flops = 2 * b_pad * (IN_DIM * H_DIM + 2 * H_DIM * MS_PAD
                         + Z_DIM * H_DIM + H_DIM * IN_DIM)
    transcendentals = b_pad * (H_DIM + IN_DIM)
    bytes_accessed = (
        2 * x_b.size + 4 * eps_b.size                 # activation inputs
        + 2 * b_pad * IN_DIM + 4 * b_pad * MS_PAD     # recon (bf16) + ms (f32)
        + 2 * (w1p.size + wmsp.size + wd1p.size + wd2p.size)   # weights read once
        + 4 * (b1p.size + bmsp.size + bd1p.size + bd2p.size))  # biases read once

    recon_p, ms_p = pl.pallas_call(
        vae_kernel,
        out_shape=out_shapes,
        grid=(n_blk,),
        in_specs=in_specs,
        out_specs=out_specs,
        scratch_shapes=[pltpu.VMEM((tb, 2 * H_DIM), jnp.bfloat16)],   # [sigmoid(h)|h]
        compiler_params=pltpu.CompilerParams(dimension_semantics=("parallel",)),
        cost_estimate=pl.CostEstimate(flops=flops,
                                      transcendentals=transcendentals,
                                      bytes_accessed=bytes_accessed),
    )(x_b, eps_b, w1p, b1p, wmsp, bmsp, wd1p, bd1p, wd2p, bd2p)

    recon = recon_p[:B].reshape(B, 1, IMG, IMG)   # reshape is free; slice only if padded
    mean = ms_p[:B, :Z_DIM]
    sig = ms_p[:B, Z_DIM:2 * Z_DIM]
    return recon, mean, sig


def init_params(key):
    """Deterministic synthetic params; linear weights stored transposed (in, out),
    biases as (1, out) rows.  Mirrors torch.nn.Linear default init scale."""
    ks = jax.random.split(key, 10)

    def lin(kw, kb, fan_in, fan_out):
        bound = 1.0 / jnp.sqrt(fan_in)
        w = jax.random.uniform(kw, (fan_in, fan_out), jnp.float32, -bound, bound)
        b = jax.random.uniform(kb, (1, fan_out), jnp.float32, -bound, bound)
        return w, b

    w1, b1 = lin(ks[0], ks[1], IN_DIM, H_DIM)     # encoder Linear(784, 256)
    wm, bm = lin(ks[2], ks[3], H_DIM, Z_DIM)      # mean_layer
    ws, bs = lin(ks[4], ks[5], H_DIM, Z_DIM)      # sigmoid_layer
    wd1, bd1 = lin(ks[6], ks[7], Z_DIM, H_DIM)    # decoder Linear(32, 256)
    wd2, bd2 = lin(ks[8], ks[9], H_DIM, IN_DIM)   # decoder Linear(256, 784)
    return (w1, b1, wm, bm, ws, bs, wd1, bd1, wd2, bd2)


def vae_reference(x_nchw, params, eps):
    """Pure-JAX f32 reference of the PyTorch forward (for correctness check)."""
    w1, b1, wm, bm, ws, bs, wd1, bd1, wd2, bd2 = params
    B = x_nchw.shape[0]
    x = x_nchw.reshape(B, IN_DIM)
    h = jnp.maximum(x @ w1 + b1, 0.0)
    mean = jax.nn.sigmoid(h) @ wm + bm
    sig = jnp.maximum(h, 0.0) @ ws + bs
    z = mean + sig * eps
    d1 = jnp.maximum(z @ wd1 + bd1, 0.0)
    recon = jax.nn.sigmoid(d1 @ wd2 + bd2)
    return recon.reshape(B, 1, IMG, IMG), mean, sig


if __name__ == "__main__":
    key = jax.random.PRNGKey(0)
    k_params, k_x, k_eps = jax.random.split(key, 3)

    B = 2
    params = init_params(k_params)
    x = jax.random.uniform(k_x, (B, 1, IMG, IMG), jnp.float32)       # NCHW input
    eps = jax.random.normal(k_eps, (B, Z_DIM), jnp.float32)          # ~ torch.randn_like

    recon, mean, sig = jax.jit(vae_forward)(x, params, eps)
    jax.block_until_ready((recon, mean, sig))

    assert recon.shape == (B, 1, IMG, IMG)
    assert mean.shape == (B, Z_DIM)
    assert sig.shape == (B, Z_DIM)

    # numerical check vs f32 reference (bf16 MXU + bf16 recon store + approx
    # reciprocal on the recon sigmoid => loose tol)
    r_ref, m_ref, s_ref = vae_reference(x, params, eps)
    assert float(jnp.max(jnp.abs(recon.astype(jnp.float32) - r_ref))) < 5e-2
    assert float(jnp.max(jnp.abs(mean - m_ref))) < 5e-2
    assert float(jnp.max(jnp.abs(sig - s_ref))) < 5e-2

    print("KERNEL_OK")
</pallas_src>

<mosaic_0001>
module attributes {stable_mosaic.version = 11 : i64} {
  func.func @vae_kernel(%arg0: i32, %arg1: memref<16x784xbf16, #tpu.memory_space<vmem>>, %arg2: memref<16x32xf32, #tpu.memory_space<vmem>>, %arg3: memref<784x256xbf16, #tpu.memory_space<vmem>>, %arg4: memref<1x256xf32, #tpu.memory_space<vmem>>, %arg5: memref<512x128xbf16, #tpu.memory_space<vmem>>, %arg6: memref<1x128xf32, #tpu.memory_space<vmem>>, %arg7: memref<32x256xbf16, #tpu.memory_space<vmem>>, %arg8: memref<1x256xf32, #tpu.memory_space<vmem>>, %arg9: memref<256x784xbf16, #tpu.memory_space<vmem>>, %arg10: memref<1x784xf32, #tpu.memory_space<vmem>>, %arg11: memref<16x784xbf16, #tpu.memory_space<vmem>>, %arg12: memref<16x128xf32, #tpu.memory_space<vmem>>, %arg13: memref<16x512xbf16, #tpu.memory_space<vmem>>) attributes {dimension_semantics = [#tpu.dimension_semantics<parallel>], iteration_bounds = array<i64: 1>, scalar_prefetch = 0 : i64, scratch_operands = 1 : i64, tpu.core_type = #tpu.core_type<tc>, window_params = [{transform_indices = @transform_0, window_bounds = array<i64: 16, 784>}, {transform_indices = @transform_1, window_bounds = array<i64: 16, 32>}, {pipeline_mode = #tpu.pipeline_mode<synchronous>, transform_indices = @transform_2, window_bounds = array<i64: 784, 256>}, {pipeline_mode = #tpu.pipeline_mode<synchronous>, transform_indices = @transform_3, window_bounds = array<i64: 1, 256>}, {pipeline_mode = #tpu.pipeline_mode<synchronous>, transform_indices = @transform_4, window_bounds = array<i64: 512, 128>}, {pipeline_mode = #tpu.pipeline_mode<synchronous>, transform_indices = @transform_5, window_bounds = array<i64: 1, 128>}, {pipeline_mode = #tpu.pipeline_mode<synchronous>, transform_indices = @transform_6, window_bounds = array<i64: 32, 256>}, {pipeline_mode = #tpu.pipeline_mode<synchronous>, transform_indices = @transform_7, window_bounds = array<i64: 1, 256>}, {pipeline_mode = #tpu.pipeline_mode<synchronous>, transform_indices = @transform_8, window_bounds = array<i64: 256, 784>}, {pipeline_mode = #tpu.pipeline_mode<synchronous>, transform_indices = @transform_9, window_bounds = array<i64: 1, 784>}, {transform_indices = @transform_10, window_bounds = array<i64: 16, 784>}, {transform_indices = @transform_11, window_bounds = array<i64: 16, 128>}]} {
    %c0 = arith.constant 0 : index
    %c0_0 = arith.constant 0 : index
    %0 = vector.load %arg1[%c0, %c0_0] : memref<16x784xbf16, #tpu.memory_space<vmem>>, vector<16x784xbf16>
    %c0_1 = arith.constant 0 : index
    %c0_2 = arith.constant 0 : index
    %1 = vector.load %arg3[%c0_1, %c0_2] : memref<784x256xbf16, #tpu.memory_space<vmem>>, vector<784x256xbf16>
    %cst = arith.constant dense<0.000000e+00> : vector<16x256xf32>
    %2 = tpu.matmul %0, %1, %cst {dimension_numbers = #tpu.dot_dimension_numbers<[1], [0], [0], [1], [0, 0, 1, 1], [], []>} : vector<16x784xbf16>, vector<784x256xbf16>, vector<16x256xf32> -> vector<16x256xf32>
    %c0_3 = arith.constant 0 : index
    %c0_4 = arith.constant 0 : index
    %3 = vector.load %arg4[%c0_3, %c0_4] : memref<1x256xf32, #tpu.memory_space<vmem>>, vector<1x256xf32>
    %4 = vector.broadcast %3 : vector<1x256xf32> to vector<16x256xf32>
    %5 = arith.addf %2, %4 : vector<16x256xf32>
    %cst_5 = arith.constant 0.000000e+00 : f32
    %6 = vector.broadcast %cst_5 : f32 to vector<16x256xf32>
    %7 = arith.maximumf %5, %6 : vector<16x256xf32>
    %cst_6 = arith.constant 0.000000e+00 : f32
    %8 = vector.broadcast %cst_6 : f32 to vector<16x256xf32>
    %9 = arith.subf %8, %7 : vector<16x256xf32>
    %10 = math.exp %9 : vector<16x256xf32>
    %cst_7 = arith.constant 1.000000e+00 : f32
    %11 = vector.broadcast %cst_7 : f32 to vector<16x256xf32>
    %12 = arith.addf %11, %10 : vector<16x256xf32>
    %cst_8 = arith.constant 1.000000e+00 : f32
    %13 = vector.broadcast %cst_8 : f32 to vector<16x256xf32>
    %14 = arith.divf %13, %12 : vector<16x256xf32>
    %15 = arith.truncf %14 : vector<16x256xf32> to vector<16x256xbf16>
    %c0_9 = arith.constant 0 : index
    %c0_10 = arith.constant 0 : index
    %16 = vector.load %arg13[%c0_9, %c0_10] : memref<16x512xbf16, #tpu.memory_space<vmem>>, vector<16x256xbf16>
    tpu.vector_store %arg13[%c0_9, %c0_10], %15 {strides = array<i32>} : memref<16x512xbf16, #tpu.memory_space<vmem>>, vector<16x256xbf16>,
    %17 = arith.truncf %7 : vector<16x256xf32> to vector<16x256xbf16>
    %c0_11 = arith.constant 0 : index
    %c256 = arith.constant 256 : index
    %18 = vector.load %arg13[%c0_11, %c256] : memref<16x512xbf16, #tpu.memory_space<vmem>>, vector<16x256xbf16>
    tpu.vector_store %arg13[%c0_11, %c256], %17 {strides = array<i32>} : memref<16x512xbf16, #tpu.memory_space<vmem>>, vector<16x256xbf16>,
    %c0_12 = arith.constant 0 : index
    %c0_13 = arith.constant 0 : index
    %19 = vector.load %arg13[%c0_12, %c0_13] : memref<16x512xbf16, #tpu.memory_space<vmem>>, vector<16x512xbf16>
    %c0_14 = arith.constant 0 : index
    %c0_15 = arith.constant 0 : index
    %20 = vector.load %arg5[%c0_14, %c0_15] : memref<512x128xbf16, #tpu.memory_space<vmem>>, vector<512x128xbf16>
    %cst_16 = arith.constant dense<0.000000e+00> : vector<16x128xf32>
    %21 = tpu.matmul %19, %20, %cst_16 {dimension_numbers = #tpu.dot_dimension_numbers<[1], [0], [0], [1], [0, 0, 1, 1], [], []>} : vector<16x512xbf16>, vector<512x128xbf16>, vector<16x128xf32> -> vector<16x128xf32>
    %c0_17 = arith.constant 0 : index
    %c0_18 = arith.constant 0 : index
    %22 = vector.load %arg6[%c0_17, %c0_18] : memref<1x128xf32, #tpu.memory_space<vmem>>, vector<1x128xf32>
    %23 = vector.broadcast %22 : vector<1x128xf32> to vector<16x128xf32>
    %24 = arith.addf %21, %23 : vector<16x128xf32>
    %c0_19 = arith.constant 0 : index
    %c0_20 = arith.constant 0 : index
    %25 = vector.load %arg12[%c0_19, %c0_20] : memref<16x128xf32, #tpu.memory_space<vmem>>, vector<16x128xf32>
    tpu.vector_store %arg12[%c0_19, %c0_20], %24 {strides = array<i32>} : memref<16x128xf32, #tpu.memory_space<vmem>>, vector<16x128xf32>,
    %26 = vector.extract_strided_slice %24 {offsets = [0, 0], sizes = [16, 32], strides = [1, 1]} : vector<16x128xf32> to vector<16x32xf32>
    %27 = vector.extract_strided_slice %24 {offsets = [0, 32], sizes = [16, 32], strides = [1, 1]} : vector<16x128xf32> to vector<16x32xf32>
    %c0_21 = arith.constant 0 : index
    %c0_22 = arith.constant 0 : index
    %28 = vector.load %arg2[%c0_21, %c0_22] : memref<16x32xf32, #tpu.memory_space<vmem>>, vector<16x32xf32>
    %29 = arith.mulf %27, %28 : vector<16x32xf32>
    %30 = arith.addf %26, %29 : vector<16x32xf32>
    %31 = arith.truncf %30 : vector<16x32xf32> to vector<16x32xbf16>
    %c0_23 = arith.constant 0 : index
    %c0_24 = arith.constant 0 : index
    %32 = vector.load %arg7[%c0_23, %c0_24] : memref<32x256xbf16, #tpu.memory_space<vmem>>, vector<32x256xbf16>
    %cst_25 = arith.constant dense<0.000000e+00> : vector<16x256xf32>
    %33 = tpu.matmul %31, %32, %cst_25 {dimension_numbers = #tpu.dot_dimension_numbers<[1], [0], [0], [1], [0, 0, 1, 1], [], []>} : vector<16x32xbf16>, vector<32x256xbf16>, vector<16x256xf32> -> vector<16x256xf32>
    %c0_26 = arith.constant 0 : index
    %c0_27 = arith.constant 0 : index
    %34 = vector.load %arg8[%c0_26, %c0_27] : memref<1x256xf32, #tpu.memory_space<vmem>>, vector<1x256xf32>
    %35 = vector.broadcast %34 : vector<1x256xf32> to vector<16x256xf32>
    %36 = arith.addf %33, %35 : vector<16x256xf32>
    %cst_28 = arith.constant 0.000000e+00 : f32
    %37 = vector.broadcast %cst_28 : f32 to vector<16x256xf32>
    %38 = arith.maximumf %36, %37 : vector<16x256xf32>
    %39 = arith.truncf %38 : vector<16x256xf32> to vector<16x256xbf16>
    %c0_29 = arith.constant 0 : index
    %c0_30 = arith.constant 0 : index
    %40 = vector.load %arg9[%c0_29, %c0_30] : memref<256x784xbf16, #tpu.memory_space<vmem>>, vector<256x784xbf16>
    %cst_31 = arith.constant dense<0.000000e+00> : vector<16x784xf32>
    %41 = tpu.matmul %39, %40, %cst_31 {dimension_numbers = #tpu.dot_dimension_numbers<[1], [0], [0], [1], [0, 0, 1, 1], [], []>} : vector<16x256xbf16>, vector<256x784xbf16>, vector<16x784xf32> -> vector<16x784xf32>
    %c0_32 = arith.constant 0 : index
    %c0_33 = arith.constant 0 : index
    %42 = vector.load %arg10[%c0_32, %c0_33] : memref<1x784xf32, #tpu.memory_space<vmem>>, vector<1x784xf32>
    %43 = vector.broadcast %42 : vector<1x784xf32> to vector<16x784xf32>
    %44 = arith.addf %41, %43 : vector<16x784xf32>
    %cst_34 = arith.constant 0.000000e+00 : f32
    %45 = vector.broadcast %cst_34 : f32 to vector<16x784xf32>
    %46 = arith.subf %45, %44 : vector<16x784xf32>
    %47 = math.exp %46 : vector<16x784xf32>
    %cst_35 = arith.constant 1.000000e+00 : f32
    %48 = vector.broadcast %cst_35 : f32 to vector<16x784xf32>
    %49 = arith.addf %48, %47 : vector<16x784xf32>
    %50 = tpu.reciprocal %49 {approx = true} : vector<16x784xf32> -> vector<16x784xf32>
    %51 = arith.truncf %50 : vector<16x784xf32> to vector<16x784xbf16>
    %c0_36 = arith.constant 0 : index
    %c0_37 = arith.constant 0 : index
    %52 = vector.load %arg11[%c0_36, %c0_37] : memref<16x784xbf16, #tpu.memory_space<vmem>>, vector<16x784xbf16>
    tpu.vector_store %arg11[%c0_36, %c0_37], %51 {strides = array<i32>} : memref<16x784xbf16, #tpu.memory_space<vmem>>, vector<16x784xbf16>,
    return
  }
  func.func @transform_0(%arg0: i32) -> (i32, i32) {
    %c0_i32 = arith.constant 0 : i32
    %c0_i32_0 = arith.constant 0 : i32
    return %arg0, %c0_i32 : i32, i32
  }
  func.func @transform_1(%arg0: i32) -> (i32, i32) {
    %c0_i32 = arith.constant 0 : i32
    %c0_i32_0 = arith.constant 0 : i32
    return %arg0, %c0_i32 : i32, i32
  }
  func.func @transform_2(%arg0: i32) -> (i32, i32) {
    %c0_i32 = arith.constant 0 : i32
    %c0_i32_0 = arith.constant 0 : i32
    %c0_i32_1 = arith.constant 0 : i32
    return %c0_i32, %c0_i32_0 : i32, i32
  }
  func.func @transform_3(%arg0: i32) -> (i32, i32) {
    %c0_i32 = arith.constant 0 : i32
    %c0_i32_0 = arith.constant 0 : i32
    %c0_i32_1 = arith.constant 0 : i32
    return %c0_i32, %c0_i32_0 : i32, i32
  }
  func.func @transform_4(%arg0: i32) -> (i32, i32) {
    %c0_i32 = arith.constant 0 : i32
    %c0_i32_0 = arith.constant 0 : i32
    %c0_i32_1 = arith.constant 0 : i32
    return %c0_i32, %c0_i32_0 : i32, i32
  }
  func.func @transform_5(%arg0: i32) -> (i32, i32) {
    %c0_i32 = arith.constant 0 : i32
    %c0_i32_0 = arith.constant 0 : i32
    %c0_i32_1 = arith.constant 0 : i32
    return %c0_i32, %c0_i32_0 : i32, i32
  }
  func.func @transform_6(%arg0: i32) -> (i32, i32) {
    %c0_i32 = arith.constant 0 : i32
    %c0_i32_0 = arith.constant 0 : i32
    %c0_i32_1 = arith.constant 0 : i32
    return %c0_i32, %c0_i32_0 : i32, i32
  }
  func.func @transform_7(%arg0: i32) -> (i32, i32) {
    %c0_i32 = arith.constant 0 : i32
    %c0_i32_0 = arith.constant 0 : i32
    %c0_i32_1 = arith.constant 0 : i32
    return %c0_i32, %c0_i32_0 : i32, i32
  }
  func.func @transform_8(%arg0: i32) -> (i32, i32) {
    %c0_i32 = arith.constant 0 : i32
    %c0_i32_0 = arith.constant 0 : i32
    %c0_i32_1 = arith.constant 0 : i32
    return %c0_i32, %c0_i32_0 : i32, i32
  }
  func.func @transform_9(%arg0: i32) -> (i32, i32) {
    %c0_i32 = arith.constant 0 : i32
    %c0_i32_0 = arith.constant 0 : i32
    %c0_i32_1 = arith.constant 0 : i32
    return %c0_i32, %c0_i32_0 : i32, i32
  }
  func.func @transform_10(%arg0: i32) -> (i32, i32) {
    %c0_i32 = arith.constant 0 : i32
    %c0_i32_0 = arith.constant 0 : i32
    return %arg0, %c0_i32 : i32, i32
  }
  func.func @transform_11(%arg0: i32) -> (i32, i32) {
    %c0_i32 = arith.constant 0 : i32
    %c0_i32_0 = arith.constant 0 : i32
    return %arg0, %c0_i32 : i32, i32
  }
}

</mosaic_0001>

<llo_original>
// kernel: vae_forward.1
$region0: #{vae_forward.1}
  #allocation0 [shape = 'u32[]', space=smem, size = 0x4, offset = 0x4, fixed_abs, tag = 'smem constant byte address 0x4 - core index']
  #allocation1 [shape = 'u32[144,128]{1,0:T(1,128)}', space=vmem, size = 0x12000, scoped, tag = 'internal scratch']
  #allocation2 [shape = 'bf16[16,512]{1,0:T(8,128)(2,1)}', space=vmem, size = 0x4000, scoped, tag = 'scratch operand']
  %s0 = inlined_call_operand.vmem [shape: bf16[16,784], index: 0, kind: input, shape index: {}]
  %s1 = inlined_call_operand.vmem [shape: f32[16,32], index: 1, kind: input, shape index: {}]
  %s2 = inlined_call_operand.vmem [shape: bf16[784,256], index: 2, kind: input, shape index: {}]
  %s3 = inlined_call_operand.vmem [shape: f32[1,256], index: 3, kind: input, shape index: {}]
  %s4 = inlined_call_operand.vmem [shape: bf16[512,128], index: 4, kind: input, shape index: {}]
  %s5 = inlined_call_operand.vmem [shape: f32[1,128], index: 5, kind: input, shape index: {}]
  %s6 = inlined_call_operand.vmem [shape: bf16[32,256], index: 6, kind: input, shape index: {}]
  %s7 = inlined_call_operand.vmem [shape: f32[1,256], index: 7, kind: input, shape index: {}]
  %s8 = inlined_call_operand.vmem [shape: bf16[256,784], index: 8, kind: input, shape index: {}]
  %s9 = inlined_call_operand.vmem [shape: f32[1,784], index: 9, kind: input, shape index: {}]
  %s10 = inlined_call_operand.vmem [shape: bf16[16,784], index: 10, kind: output, shape index: {0}]
  %s11 = inlined_call_operand.vmem [shape: f32[16,128], index: 11, kind: output, shape index: {1}]
  %12 = xla_tuple %s10, %s11
  %s13 = sld [smem:[#allocation0]]
  $region58: #{vae_forward.1} parent=0
    _
  %s15 = ssub.s32 1, %s13
  %s16 = scalar_select 0, %s15, %s13
  // Predicated region
  $region2: #{vae_forward.1} parent=0 // pred_check
    _
  $region3: #{vae_forward.1} parent=0 // pred_check_branch
    %18 = sbr.rel (0) target = $region5
  $region4: #{vae_forward.1} parent=0 // pred_region
    _
  $region5: #{vae_forward.1} parent=0 // pred_fallthru
    _
  // Predicated region
  $region6: #{vae_forward.1} parent=0 // pred_check
    _
  $region7: #{vae_forward.1} parent=0 // pred_check_branch
    %20 = sbr.rel (0) target = $region9
  $region8: #{vae_forward.1} parent=0 // pred_region
    _
  $region9: #{vae_forward.1} parent=0 // pred_fallthru
    _
  // Predicated region
  $region10: #{vae_forward.1} parent=0 // pred_check
    _
  $region11: #{vae_forward.1} parent=0 // pred_check_branch
    %22 = sbr.rel (0) target = $region13
  $region12: #{vae_forward.1} parent=0 // pred_region
    _
  $region13: #{vae_forward.1} parent=0 // pred_fallthru
    _
  // Predicated region
  $region14: #{vae_forward.1} parent=0 // pred_check
    _
  $region15: #{vae_forward.1} parent=0 // pred_check_branch
    %24 = sbr.rel (0) target = $region17
  $region16: #{vae_forward.1} parent=0 // pred_region
    _
  $region17: #{vae_forward.1} parent=0 // pred_fallthru
    _
  // Predicated region
  $region18: #{vae_forward.1} parent=0 // pred_check
    _
  $region19: #{vae_forward.1} parent=0 // pred_check_branch
    %26 = sbr.rel (0) target = $region21
  $region20: #{vae_forward.1} parent=0 // pred_region
    _
  $region21: #{vae_forward.1} parent=0 // pred_fallthru
    _
  // Predicated region
  $region22: #{vae_forward.1} parent=0 // pred_check
    _
  $region23: #{vae_forward.1} parent=0 // pred_check_branch
    %28 = sbr.rel (0) target = $region25
  $region24: #{vae_forward.1} parent=0 // pred_region
    _
  $region25: #{vae_forward.1} parent=0 // pred_fallthru
    _
  // Predicated region
  $region26: #{vae_forward.1} parent=0 // pred_check
    _
  $region27: #{vae_forward.1} parent=0 // pred_check_branch
    %30 = sbr.rel (0) target = $region29
  $region28: #{vae_forward.1} parent=0 // pred_region
    _
  $region29: #{vae_forward.1} parent=0 // pred_fallthru
    _
  // Predicated region
  $region30: #{vae_forward.1} parent=0 // pred_check
    _
  $region31: #{vae_forward.1} parent=0 // pred_check_branch
    %32 = sbr.rel (0) target = $region33
  $region32: #{vae_forward.1} parent=0 // pred_region
    _
  $region33: #{vae_forward.1} parent=0 // pred_fallthru
    _
  // Predicated region
  $region34: #{vae_forward.1} parent=0 // pred_check
    _
  $region35: #{vae_forward.1} parent=0 // pred_check_branch
    %34 = sbr.rel (0) target = $region37
  $region36: #{vae_forward.1} parent=0 // pred_region
    _
  $region37: #{vae_forward.1} parent=0 // pred_fallthru
    _
  // Predicated region
  $region38: #{vae_forward.1} parent=0 // pred_check
    _
  $region39: #{vae_forward.1} parent=0 // pred_check_branch
    %36 = sbr.rel (0) target = $region41
  $region40: #{vae_forward.1} parent=0 // pred_region
    _
  $region41: #{vae_forward.1} parent=0 // pred_fallthru
    _
  %v38 = vld [vmem:[%s0] sm:$0xff]
  %v39 = vld [vmem:[%s0 + $0x8] sm:$0xff]
  %v40 = vld [vmem:[%s0 + $0x10] sm:$0xff]
  %v41 = vld [vmem:[%s0 + $0x18] sm:$0xf]
  %v42 = vld [vmem:[%s0 + $0x1c] sm:$0xff]
  %v43 = vld [vmem:[%s0 + $0x24] sm:$0xff]
  %v44 = vld [vmem:[%s0 + $0x2c] sm:$0xff]
  %v45 = vld [vmem:[%s0 + $0x34] sm:$0xf]
  %v46 = vld [vmem:[%s2] sm:$0xff]
  %v47 = vld [vmem:[%s2 + $0x8] sm:$0xff]
  %v48 = vld [vmem:[%s2 + $0x10] sm:$0xff]
  %v49 = vld [vmem:[%s2 + $0x18] sm:$0xff]
  %v50 = vld [vmem:[%s2 + $0x20] sm:$0xff]
  %v51 = vld [vmem:[%s2 + $0x28] sm:$0xff]
  %v52 = vld [vmem:[%s2 + $0x30] sm:$0xff]
  %v53 = vld [vmem:[%s2 + $0x38] sm:$0xff]
  %v54 = vld [vmem:[%s2 + $0x40] sm:$0xff]
  %v55 = vld [vmem:[%s2 + $0x48] sm:$0xff]
  %v56 = vld [vmem:[%s2 + $0x50] sm:$0xff]
  %v57 = vld [vmem:[%s2 + $0x58] sm:$0xff]
  %v58 = vld [vmem:[%s2 + $0x60] sm:$0xff]
  %v59 = vld [vmem:[%s2 + $0x68] sm:$0xff]
  %v60 = vld [vmem:[%s2 + $0x70] sm:$0xff]
  %v61 = vld [vmem:[%s2 + $0x78] sm:$0xff]
  %v62 = vld [vmem:[%s2 + $0x80] sm:$0xff]
  %v63 = vld [vmem:[%s2 + $0x88] sm:$0xff]
  %v64 = vld [vmem:[%s2 + $0x90] sm:$0xff]
  %v65 = vld [vmem:[%s2 + $0x98] sm:$0xff]
  %v66 = vld [vmem:[%s2 + $0xa0] sm:$0xff]
  %v67 = vld [vmem:[%s2 + $0xa8] sm:$0xff]
  %v68 = vld [vmem:[%s2 + $0xb0] sm:$0xff]
  %v69 = vld [vmem:[%s2 + $0xb8] sm:$0xff]
  %v70 = vld [vmem:[%s2 + $0xc0] sm:$0xff]
  %v71 = vld [vmem:[%s2 + $0xc8] sm:$0xff]
  %v72 = vld [vmem:[%s2 + $0xd0] sm:$0xff]
  %v73 = vld [vmem:[%s2 + $0xd8] sm:$0xff]
  %v74 = vld [vmem:[%s2 + $0xe0] sm:$0xff]
  %v75 = vld [vmem:[%s2 + $0xe8] sm:$0xff]
  %v76 = vld [vmem:[%s2 + $0xf0] sm:$0xff]
  %v77 = vld [vmem:[%s2 + $0xf8] sm:$0xff]
  %v78 = vld [vmem:[%s2 + $0x100] sm:$0xff]
  %v79 = vld [vmem:[%s2 + $0x108] sm:$0xff]
  %v80 = vld [vmem:[%s2 + $0x110] sm:$0xff]
  %v81 = vld [vmem:[%s2 + $0x118] sm:$0xff]
  %v82 = vld [vmem:[%s2 + $0x120] sm:$0xff]
  %v83 = vld [vmem:[%s2 + $0x128] sm:$0xff]
  %v84 = vld [vmem:[%s2 + $0x130] sm:$0xff]
  %v85 = vld [vmem:[%s2 + $0x138] sm:$0xff]
  %v86 = vld [vmem:[%s2 + $0x140] sm:$0xff]
  %v87 = vld [vmem:[%s2 + $0x148] sm:$0xff]
  %v88 = vld [vmem:[%s2 + $0x150] sm:$0xff]
  %v89 = vld [vmem:[%s2 + $0x158] sm:$0xff]
  %v90 = vld [vmem:[%s2 + $0x160] sm:$0xff]
  %v91 = vld [vmem:[%s2 + $0x168] sm:$0xff]
  %v92 = vld [vmem:[%s2 + $0x170] sm:$0xff]
  %v93 = vld [vmem:[%s2 + $0x178] sm:$0xff]
  %v94 = vld [vmem:[%s2 + $0x180] sm:$0xff]
  %v95 = vld [vmem:[%s2 + $0x188] sm:$0xff]
  %v96 = vld [vmem:[%s2 + $0x190] sm:$0xff]
  %v97 = vld [vmem:[%s2 + $0x198] sm:$0xff]
  %v98 = vld [vmem:[%s2 + $0x1a0] sm:$0xff]
  %v99 = vld [vmem:[%s2 + $0x1a8] sm:$0xff]
  %v100 = vld [vmem:[%s2 + $0x1b0] sm:$0xff]
  %v101 = vld [vmem:[%s2 + $0x1b8] sm:$0xff]
  %v102 = vld [vmem:[%s2 + $0x1c0] sm:$0xff]
  %v103 = vld [vmem:[%s2 + $0x1c8] sm:$0xff]
  %v104 = vld [vmem:[%s2 + $0x1d0] sm:$0xff]
  %v105 = vld [vmem:[%s2 + $0x1d8] sm:$0xff]
  %v106 = vld [vmem:[%s2 + $0x1e0] sm:$0xff]
  %v107 = vld [vmem:[%s2 + $0x1e8] sm:$0xff]
  %v108 = vld [vmem:[%s2 + $0x1f0] sm:$0xff]
  %v109 = vld [vmem:[%s2 + $0x1f8] sm:$0xff]
  %v110 = vld [vmem:[%s2 + $0x200] sm:$0xff]
  %v111 = vld [vmem:[%s2 + $0x208] sm:$0xff]
  %v112 = vld [vmem:[%s2 + $0x210] sm:$0xff]
  %v113 = vld [vmem:[%s2 + $0x218] sm:$0xff]
  %v114 = vld [vmem:[%s2 + $0x220] sm:$0xff]
  %v115 = vld [vmem:[%s2 + $0x228] sm:$0xff]
  %v116 = vld [vmem:[%s2 + $0x230] sm:$0xff]
  %v117 = vld [vmem:[%s2 + $0x238] sm:$0xff]
  %v118 = vld [vmem:[%s2 + $0x240] sm:$0xff]
  %v119 = vld [vmem:[%s2 + $0x248] sm:$0xff]
  %v120 = vld [vmem:[%s2 + $0x250] sm:$0xff]
  %v121 = vld [vmem:[%s2 + $0x258] sm:$0xff]
  %v122 = vld [vmem:[%s2 + $0x260] sm:$0xff]
  %v123 = vld [vmem:[%s2 + $0x268] sm:$0xff]
  %v124 = vld [vmem:[%s2 + $0x270] sm:$0xff]
  %v125 = vld [vmem:[%s2 + $0x278] sm:$0xff]
  %v126 = vld [vmem:[%s2 + $0x280] sm:$0xff]
  %v127 = vld [vmem:[%s2 + $0x288] sm:$0xff]
  %v128 = vld [vmem:[%s2 + $0x290] sm:$0xff]
  %v129 = vld [vmem:[%s2 + $0x298] sm:$0xff]
  %v130 = vld [vmem:[%s2 + $0x2a0] sm:$0xff]
  %v131 = vld [vmem:[%s2 + $0x2a8] sm:$0xff]
  %v132 = vld [vmem:[%s2 + $0x2b0] sm:$0xff]
  %v133 = vld [vmem:[%s2 + $0x2b8] sm:$0xff]
  %v134 = vld [vmem:[%s2 + $0x2c0] sm:$0xff]
  %v135 = vld [vmem:[%s2 + $0x2c8] sm:$0xff]
  %v136 = vld [vmem:[%s2 + $0x2d0] sm:$0xff]
  %v137 = vld [vmem:[%s2 + $0x2d8] sm:$0xff]
  %v138 = vld [vmem:[%s2 + $0x2e0] sm:$0xff]
  %v139 = vld [vmem:[%s2 + $0x2e8] sm:$0xff]
  %v140 = vld [vmem:[%s2 + $0x2f0] sm:$0xff]
  %v141 = vld [vmem:[%s2 + $0x2f8] sm:$0xff]
  %v142 = vld [vmem:[%s2 + $0x300] sm:$0xff]
  %v143 = vld [vmem:[%s2 + $0x308] sm:$0xff]
  %v144 = vld [vmem:[%s3] sm:$0x3]
  %v146 = vlaneseq
  %v147 = vshrl.u32 %v146, 7
  %v148 = vsub.s32 0, %v147
  %v149 = vrot.slane %v144, %v148
  %v150 = vlaneseq
  %v151 = vshrl.u32 %v150, 7
  %v152 = vsub.s32 1, %v151
  %v153 = vrot.slane %v144, %v152
  %v164 = vunpack.c.l.b16 %v38
  %v165 = vunpack.c.h.b16 %v38
  %v166 = vunpack.c.l.b16 %v39
  %v167 = vunpack.c.h.b16 %v39
  %v168 = vunpack.c.l.b16 %v40
  %v169 = vunpack.c.h.b16 %v40
  %v170 = vunpack.c.l.b16 %v41
  %v171 = vunpack.c.l.b16 %v42
  %v172 = vunpack.c.h.b16 %v42
  %v173 = vunpack.c.l.b16 %v43
  %v174 = vunpack.c.h.b16 %v43
  %v175 = vunpack.c.l.b16 %v44
  %v176 = vunpack.c.h.b16 %v44
  %v177 = vunpack.c.l.b16 %v45
  %v178 = vpack.c.b16 %v171, %v164
  %v179 = vpack.c.b16 %v172, %v165
  %v180 = vpack.c.b16 %v173, %v166
  %v181 = vpack.c.b16 %v174, %v167
  %v182 = vpack.c.b16 %v175, %v168
  %v183 = vpack.c.b16 %v176, %v169
  %v184 = vpack.c.b16 %v177, %v170
  %v289 = vunpack.c.l.b16 %v46
  %v290 = vunpack.c.h.b16 %v46
  %v291 = vunpack.c.l.b16 %v47
  %v292 = vunpack.c.h.b16 %v47
  %v293 = vunpack.c.l.b16 %v48
  %v294 = vunpack.c.h.b16 %v48
  %v295 = vunpack.c.l.b16 %v49
  %v296 = vunpack.c.h.b16 %v49
  %v297 = vunpack.c.l.b16 %v50
  %v298 = vunpack.c.h.b16 %v50
  %v299 = vunpack.c.l.b16 %v51
  %v300 = vunpack.c.h.b16 %v51
  %v301 = vunpack.c.l.b16 %v52
  %v302 = vunpack.c.h.b16 %v52
  %v303 = vunpack.c.l.b16 %v53
  %v304 = vunpack.c.h.b16 %v53
  %v305 = vunpack.c.l.b16 %v54
  %v306 = vunpack.c.h.b16 %v54
  %v307 = vunpack.c.l.b16 %v55
  %v308 = vunpack.c.h.b16 %v55
  %v309 = vunpack.c.l.b16 %v56
  %v310 = vunpack.c.h.b16 %v56
  %v311 = vunpack.c.l.b16 %v57
  %v312 = vunpack.c.h.b16 %v57
  %v313 = vunpack.c.l.b16 %v58
  %v314 = vunpack.c.h.b16 %v58
  %v315 = vunpack.c.l.b16 %v59
  %v316 = vunpack.c.h.b16 %v59
  %v317 = vunpack.c.l.b16 %v60
  %v318 = vunpack.c.h.b16 %v60
  %v319 = vunpack.c.l.b16 %v61
  %v320 = vunpack.c.h.b16 %v61
  %v321 = vunpack.c.l.b16 %v62
  %v322 = vunpack.c.h.b16 %v62
  %v323 = vunpack.c.l.b16 %v63
  %v324 = vunpack.c.h.b16 %v63
  %v325 = vunpack.c.l.b16 %v64
  %v326 = vunpack.c.h.b16 %v64
  %v327 = vunpack.c.l.b16 %v65
  %v328 = vunpack.c.h.b16 %v65
  %v329 = vunpack.c.l.b16 %v66
  %v330 = vunpack.c.h.b16 %v66
  %v331 = vunpack.c.l.b16 %v67
  %v332 = vunpack.c.h.b16 %v67
  %v333 = vunpack.c.l.b16 %v68
  %v334 = vunpack.c.h.b16 %v68
  %v335 = vunpack.c.l.b16 %v69
  %v336 = vunpack.c.h.b16 %v69
  %v337 = vunpack.c.l.b16 %v70
  %v338 = vunpack.c.h.b16 %v70
  %v339 = vunpack.c.l.b16 %v71
  %v340 = vunpack.c.h.b16 %v71
  %v341 = vunpack.c.l.b16 %v72
  %v342 = vunpack.c.h.b16 %v72
  %v343 = vunpack.c.l.b16 %v73
  %v344 = vunpack.c.h.b16 %v73
  %v345 = vunpack.c.l.b16 %v74
  %v346 = vunpack.c.h.b16 %v74
  %v347 = vunpack.c.l.b16 %v75
  %v348 = vunpack.c.h.b16 %v75
  %v349 = vunpack.c.l.b16 %v76
  %v350 = vunpack.c.h.b16 %v76
  %v351 = vunpack.c.l.b16 %v77
  %v352 = vunpack.c.h.b16 %v77
  %v353 = vunpack.c.l.b16 %v78
  %v354 = vunpack.c.h.b16 %v78
  %v355 = vunpack.c.l.b16 %v79
  %v356 = vunpack.c.h.b16 %v79
  %v357 = vunpack.c.l.b16 %v80
  %v358 = vunpack.c.h.b16 %v80
  %v359 = vunpack.c.l.b16 %v81
  %v360 = vunpack.c.h.b16 %v81
  %v361 = vunpack.c.l.b16 %v82
  %v362 = vunpack.c.h.b16 %v82
  %v363 = vunpack.c.l.b16 %v83
  %v364 = vunpack.c.h.b16 %v83
  %v365 = vunpack.c.l.b16 %v84
  %v366 = vunpack.c.h.b16 %v84
  %v367 = vunpack.c.l.b16 %v85
  %v368 = vunpack.c.h.b16 %v85
  %v369 = vunpack.c.l.b16 %v86
  %v370 = vunpack.c.h.b16 %v86
  %v371 = vunpack.c.l.b16 %v87
  %v372 = vunpack.c.h.b16 %v87
  %v373 = vunpack.c.l.b16 %v88
  %v374 = vunpack.c.h.b16 %v88
  %v375 = vunpack.c.l.b16 %v89
  %v376 = vunpack.c.h.b16 %v89
  %v377 = vunpack.c.l.b16 %v90
  %v378 = vunpack.c.h.b16 %v90
  %v379 = vunpack.c.l.b16 %v91
  %v380 = vunpack.c.h.b16 %v91
  %v381 = vunpack.c.l.b16 %v92
  %v382 = vunpack.c.h.b16 %v92
  %v383 = vunpack.c.l.b16 %v93
  %v384 = vunpack.c.h.b16 %v93
  %v385 = vunpack.c.l.b16 %v94
  %v386 = vunpack.c.h.b16 %v94
  %v387 = vunpack.c.l.b16 %v95
  %v388 = vunpack.c.h.b16 %v95
  %v389 = vunpack.c.l.b16 %v96
  %v390 = vunpack.c.h.b16 %v96
  %v391 = vunpack.c.l.b16 %v97
  %v392 = vunpack.c.h.b16 %v97
  %v393 = vunpack.c.l.b16 %v98
  %v394 = vunpack.c.h.b16 %v98
  %v395 = vunpack.c.l.b16 %v99
  %v396 = vunpack.c.h.b16 %v99
  %v397 = vunpack.c.l.b16 %v100
  %v398 = vunpack.c.h.b16 %v100
  %v399 = vunpack.c.l.b16 %v101
  %v400 = vunpack.c.h.b16 %v101
  %v401 = vunpack.c.l.b16 %v102
  %v402 = vunpack.c.h.b16 %v102
  %v403 = vunpack.c.l.b16 %v103
  %v404 = vunpack.c.h.b16 %v103
  %v405 = vunpack.c.l.b16 %v104
  %v406 = vunpack.c.h.b16 %v104
  %v407 = vunpack.c.l.b16 %v105
  %v408 = vunpack.c.h.b16 %v105
  %v409 = vunpack.c.l.b16 %v106
  %v410 = vunpack.c.h.b16 %v106
  %v411 = vunpack.c.l.b16 %v107
  %v412 = vunpack.c.h.b16 %v107
  %v413 = vunpack.c.l.b16 %v108
  %v414 = vunpack.c.h.b16 %v108
  %v415 = vunpack.c.l.b16 %v109
  %v416 = vunpack.c.h.b16 %v109
  %v417 = vunpack.c.l.b16 %v110
  %v418 = vunpack.c.h.b16 %v110
  %v419 = vunpack.c.l.b16 %v111
  %v420 = vunpack.c.h.b16 %v111
  %v421 = vunpack.c.l.b16 %v112
  %v422 = vunpack.c.h.b16 %v112
  %v423 = vunpack.c.l.b16 %v113
  %v424 = vunpack.c.h.b16 %v113
  %v425 = vunpack.c.l.b16 %v114
  %v426 = vunpack.c.h.b16 %v114
  %v427 = vunpack.c.l.b16 %v115
  %v428 = vunpack.c.h.b16 %v115
  %v429 = vunpack.c.l.b16 %v116
  %v430 = vunpack.c.h.b16 %v116
  %v431 = vunpack.c.l.b16 %v117
  %v432 = vunpack.c.h.b16 %v117
  %v433 = vunpack.c.l.b16 %v118
  %v434 = vunpack.c.h.b16 %v118
  %v435 = vunpack.c.l.b16 %v119
  %v436 = vunpack.c.h.b16 %v119
  %v437 = vunpack.c.l.b16 %v120
  %v438 = vunpack.c.h.b16 %v120
  %v439 = vunpack.c.l.b16 %v121
  %v440 = vunpack.c.h.b16 %v121
  %v441 = vunpack.c.l.b16 %v122
  %v442 = vunpack.c.h.b16 %v122
  %v443 = vunpack.c.l.b16 %v123
  %v444 = vunpack.c.h.b16 %v123
  %v445 = vunpack.c.l.b16 %v124
  %v446 = vunpack.c.h.b16 %v124
  %v447 = vunpack.c.l.b16 %v125
  %v448 = vunpack.c.h.b16 %v125
  %v449 = vunpack.c.l.b16 %v126
  %v450 = vunpack.c.h.b16 %v126
  %v451 = vunpack.c.l.b16 %v127
  %v452 = vunpack.c.h.b16 %v127
  %v453 = vunpack.c.l.b16 %v128
  %v454 = vunpack.c.h.b16 %v128
  %v455 = vunpack.c.l.b16 %v129
  %v456 = vunpack.c.h.b16 %v129
  %v457 = vunpack.c.l.b16 %v130
  %v458 = vunpack.c.h.b16 %v130
  %v459 = vunpack.c.l.b16 %v131
  %v460 = vunpack.c.h.b16 %v131
  %v461 = vunpack.c.l.b16 %v132
  %v462 = vunpack.c.h.b16 %v132
  %v463 = vunpack.c.l.b16 %v133
  %v464 = vunpack.c.h.b16 %v133
  %v465 = vunpack.c.l.b16 %v134
  %v466 = vunpack.c.h.b16 %v134
  %v467 = vunpack.c.l.b16 %v135
  %v468 = vunpack.c.h.b16 %v135
  %v469 = vunpack.c.l.b16 %v136
  %v470 = vunpack.c.h.b16 %v136
  %v471 = vunpack.c.l.b16 %v137
  %v472 = vunpack.c.h.b16 %v137
  %v473 = vunpack.c.l.b16 %v138
  %v474 = vunpack.c.h.b16 %v138
  %v475 = vunpack.c.l.b16 %v139
  %v476 = vunpack.c.h.b16 %v139
  %v477 = vunpack.c.l.b16 %v140
  %v478 = vunpack.c.h.b16 %v140
  %v479 = vunpack.c.l.b16 %v141
  %v480 = vunpack.c.h.b16 %v141
  %v481 = vunpack.c.l.b16 %v142
  %v482 = vunpack.c.h.b16 %v142
  %v483 = vunpack.c.l.b16 %v143
  %v484 = vunpack.c.h.b16 %v143
  %v485 = vpack.c.b16 %v291, %v289
  %v486 = vpack.c.b16 %v292, %v290
  %v487 = vpack.c.b16 %v295, %v293
  %v488 = vpack.c.b16 %v296, %v294
  %v489 = vpack.c.b16 %v299, %v297
  %v490 = vpack.c.b16 %v300, %v298
  %v491 = vpack.c.b16 %v303, %v301
  %v492 = vpack.c.b16 %v304, %v302
  %v493 = vpack.c.b16 %v307, %v305
  %v494 = vpack.c.b16 %v308, %v306
  %v495 = vpack.c.b16 %v311, %v309
  %v496 = vpack.c.b16 %v312, %v310
  %v497 = vpack.c.b16 %v315, %v313
  %v498 = vpack.c.b16 %v316, %v314
  %v499 = vpack.c.b16 %v319, %v317
  %v500 = vpack.c.b16 %v320, %v318
  %v501 = vpack.c.b16 %v323, %v321
  %v502 = vpack.c.b16 %v324, %v322
  %v503 = vpack.c.b16 %v327, %v325
  %v504 = vpack.c.b16 %v328, %v326
  %v505 = vpack.c.b16 %v331, %v329
  %v506 = vpack.c.b16 %v332, %v330
  %v507 = vpack.c.b16 %v335, %v333
  %v508 = vpack.c.b16 %v336, %v334
  %v509 = vpack.c.b16 %v339, %v337
  %v510 = vpack.c.b16 %v340, %v338
  %v511 = vpack.c.b16 %v343, %v341
  %v512 = vpack.c.b16 %v344, %v342
  %v513 = vpack.c.b16 %v347, %v345
  %v514 = vpack.c.b16 %v348, %v346
  %v515 = vpack.c.b16 %v351, %v349
  %v516 = vpack.c.b16 %v352, %v350
  %v517 = vpack.c.b16 %v355, %v353
  %v518 = vpack.c.b16 %v356, %v354
  %v519 = vpack.c.b16 %v359, %v357
  %v520 = vpack.c.b16 %v360, %v358
  %v521 = vpack.c.b16 %v363, %v361
  %v522 = vpack.c.b16 %v364, %v362
  %v523 = vpack.c.b16 %v367, %v365
  %v524 = vpack.c.b16 %v368, %v366
  %v525 = vpack.c.b16 %v371, %v369
  %v526 = vpack.c.b16 %v372, %v370
  %v527 = vpack.c.b16 %v375, %v373
  %v528 = vpack.c.b16 %v376, %v374
  %v529 = vpack.c.b16 %v379, %v377
  %v530 = vpack.c.b16 %v380, %v378
  %v531 = vpack.c.b16 %v383, %v381
  %v532 = vpack.c.b16 %v384, %v382
  %v533 = vpack.c.b16 %v387, %v385
  %v534 = vpack.c.b16 %v388, %v386
  %v535 = vpack.c.b16 %v391, %v389
  %v536 = vpack.c.b16 %v392, %v390
  %v537 = vpack.c.b16 %v395, %v393
  %v538 = vpack.c.b16 %v396, %v394
  %v539 = vpack.c.b16 %v399, %v397
  %v540 = vpack.c.b16 %v400, %v398
  %v541 = vpack.c.b16 %v403, %v401
  %v542 = vpack.c.b16 %v404, %v402
  %v543 = vpack.c.b16 %v407, %v405
  %v544 = vpack.c.b16 %v408, %v406
  %v545 = vpack.c.b16 %v411, %v409
  %v546 = vpack.c.b16 %v412, %v410
  %v547 = vpack.c.b16 %v415, %v413
  %v548 = vpack.c.b16 %v416, %v414
  %v549 = vpack.c.b16 %v419, %v417
  %v550 = vpack.c.b16 %v420, %v418
  %v551 = vpack.c.b16 %v423, %v421
  %v552 = vpack.c.b16 %v424, %v422
  %v553 = vpack.c.b16 %v427, %v425
  %v554 = vpack.c.b16 %v428, %v426
  %v555 = vpack.c.b16 %v431, %v429
  %v556 = vpack.c.b16 %v432, %v430
  %v557 = vpack.c.b16 %v435, %v433
  %v558 = vpack.c.b16 %v436, %v434
  %v559 = vpack.c.b16 %v439, %v437
  %v560 = vpack.c.b16 %v440, %v438
  %v561 = vpack.c.b16 %v443, %v441
  %v562 = vpack.c.b16 %v444, %v442
  %v563 = vpack.c.b16 %v447, %v445
  %v564 = vpack.c.b16 %v448, %v446
  %v565 = vpack.c.b16 %v451, %v449
  %v566 = vpack.c.b16 %v452, %v450
  %v567 = vpack.c.b16 %v455, %v453
  %v568 = vpack.c.b16 %v456, %v454
  %v569 = vpack.c.b16 %v459, %v457
  %v570 = vpack.c.b16 %v460, %v458
  %v571 = vpack.c.b16 %v463, %v461
  %v572 = vpack.c.b16 %v464, %v462
  %v573 = vpack.c.b16 %v467, %v465
  %v574 = vpack.c.b16 %v468, %v466
  %v575 = vpack.c.b16 %v471, %v469
  %v576 = vpack.c.b16 %v472, %v470
  %v577 = vpack.c.b16 %v475, %v473
  %v578 = vpack.c.b16 %v476, %v474
  %v579 = vpack.c.b16 %v479, %v477
  %v580 = vpack.c.b16 %v480, %v478
  %v581 = vpack.c.b16 %v483, %v481
  %v582 = vpack.c.b16 %v484, %v482
  %vm681 = vcmask 130048
  %v683 = vsel %vm681, %v184, 0
  %685 = vmatprep.subr.bf16.mxu0 %v500
  %686 = vmatpush1.bf16.msra.mxu0 %v499
  %687 = vmatprep.subr.bf16.mxu0 %v498
  %688 = vmatpush1.bf16.msra.mxu0 %v497
  %689 = vmatprep.subr.bf16.mxu0 %v496
  %690 = vmatpush1.bf16.msra.mxu0 %v495
  %691 = vmatprep.subr.bf16.mxu0 %v494
  %692 = vmatpush1.bf16.msra.mxu0 %v493
  %693 = vmatprep.subr.bf16.mxu0 %v492
  %694 = vmatpush1.bf16.msra.mxu0 %v491
  %695 = vmatprep.subr.bf16.mxu0 %v490
  %696 = vmatpush1.bf16.msra.mxu0 %v489
  %697 = vmatprep.subr.bf16.mxu0 %v488
  %698 = vmatpush1.bf16.msra.mxu0 %v487
  %699 = vmatprep.subr.bf16.mxu0 %v486
  %700 = vmatpush1.bf16.msra.mxu0 %v485
  %701 = vmatprep.subr.bf16.mxu0 %v516
  %702 = vmatpush2.bf16.msra.mxu0 %v515
  %703 = vmatprep.subr.bf16.mxu0 %v514
  %704 = vmatpush2.bf16.msra.mxu0 %v513
  %705 = vmatprep.subr.bf16.mxu0 %v512
  %706 = vmatpush2.bf16.msra.mxu0 %v511
  %707 = vmatprep.subr.bf16.mxu0 %v510
  %708 = vmatpush2.bf16.msra.mxu0 %v509
  %709 = vmatprep.subr.bf16.mxu0 %v508
  %710 = vmatpush2.bf16.msra.mxu0 %v507
  %711 = vmatprep.subr.bf16.mxu0 %v506
  %712 = vmatpush2.bf16.msra.mxu0 %v505
  %713 = vmatprep.subr.bf16.mxu0 %v504
  %714 = vmatpush2.bf16.msra.mxu0 %v503
  %715 = vmatprep.subr.bf16.mxu0 %v502
  %716 = vmatpush2.bf16.msra.mxu0 %v501
  %717 = vmatprep.mubr.bf16.mxu0 %v179
  %718 = vmatmul.mubr.bf16.gmra.mxu0 %v178
  %v719 = vpop.f32.mrf.mxu0
  %v720 = vadd.f32 %v149, %v719
  %v721 = vpop.f32.mrf.mxu0
  %v722 = vadd.f32 %v153, %v721
  %v723 = vpop.f32.mrf.mxu0
  %v724 = vadd.f32 %v149, %v723
  %v725 = vpop.f32.mrf.mxu0
  %v726 = vadd.f32 %v153, %v725
  %727 = vdwg.mxu0
  %728 = vmatprep.subr.bf16.mxu0 %v532
  %729 = vmatpush1.bf16.msra.mxu0 %v531
  %730 = vmatprep.subr.bf16.mxu0 %v530
  %731 = vmatpush1.bf16.msra.mxu0 %v529
  %732 = vmatprep.subr.bf16.mxu0 %v528
  %733 = vmatpush1.bf16.msra.mxu0 %v527
  %734 = vmatprep.subr.bf16.mxu0 %v526
  %735 = vmatpush1.bf16.msra.mxu0 %v525
  %736 = vmatprep.subr.bf16.mxu0 %v524
  %737 = vmatpush1.bf16.msra.mxu0 %v523
  %738 = vmatprep.subr.bf16.mxu0 %v522
  %739 = vmatpush1.bf16.msra.mxu0 %v521
  %740 = vmatprep.subr.bf16.mxu0 %v520
  %741 = vmatpush1.bf16.msra.mxu0 %v519
  %742 = vmatprep.subr.bf16.mxu0 %v518
  %743 = vmatpush1.bf16.msra.mxu0 %v517
  %744 = vmatprep.subr.bf16.mxu0 %v548
  %745 = vmatpush2.bf16.msra.mxu0 %v547
  %746 = vmatprep.subr.bf16.mxu0 %v546
  %747 = vmatpush2.bf16.msra.mxu0 %v545
  %748 = vmatprep.subr.bf16.mxu0 %v544
  %749 = vmatpush2.bf16.msra.mxu0 %v543
  %750 = vmatprep.subr.bf16.mxu0 %v542
  %751 = vmatpush2.bf16.msra.mxu0 %v541
  %752 = vmatprep.subr.bf16.mxu0 %v540
  %753 = vmatpush2.bf16.msra.mxu0 %v539
  %754 = vmatprep.subr.bf16.mxu0 %v538
  %755 = vmatpush2.bf16.msra.mxu0 %v537
  %756 = vmatprep.subr.bf16.mxu0 %v536
  %757 = vmatpush2.bf16.msra.mxu0 %v535
  %758 = vmatprep.subr.bf16.mxu0 %v534
  %759 = vmatpush2.bf16.msra.mxu0 %v533
  %760 = vmatprep.mubr.bf16.mxu0 %v181
  %761 = vmatmul.mubr.bf16.gmra.mxu0 %v180
  %v762 = vpop.f32.mrf.mxu0
  %v763 = vadd.f32 %v720, %v762
  %v764 = vpop.f32.mrf.mxu0
  %v765 = vadd.f32 %v722, %v764
  %v766 = vpop.f32.mrf.mxu0
  %v767 = vadd.f32 %v724, %v766
  %v768 = vpop.f32.mrf.mxu0
  %v769 = vadd.f32 %v726, %v768
  %770 = vdwg.mxu0
  %771 = vmatprep.subr.bf16.mxu0 %v564
  %772 = vmatpush1.bf16.msra.mxu0 %v563
  %773 = vmatprep.subr.bf16.mxu0 %v562
  %774 = vmatpush1.bf16.msra.mxu0 %v561
  %775 = vmatprep.subr.bf16.mxu0 %v560
  %776 = vmatpush1.bf16.msra.mxu0 %v559
  %777 = vmatprep.subr.bf16.mxu0 %v558
  %778 = vmatpush1.bf16.msra.mxu0 %v557
  %779 = vmatprep.subr.bf16.mxu0 %v556
  %780 = vmatpush1.bf16.msra.mxu0 %v555
  %781 = vmatprep.subr.bf16.mxu0 %v554
  %782 = vmatpush1.bf16.msra.mxu0 %v553
  %783 = vmatprep.subr.bf16.mxu0 %v552
  %784 = vmatpush1.bf16.msra.mxu0 %v551
  %785 = vmatprep.subr.bf16.mxu0 %v550
  %786 = vmatpush1.bf16.msra.mxu0 %v549
  %787 = vmatprep.subr.bf16.mxu0 %v580
  %788 = vmatpush2.bf16.msra.mxu0 %v579
  %789 = vmatprep.subr.bf16.mxu0 %v578
  %790 = vmatpush2.bf16.msra.mxu0 %v577
  %791 = vmatprep.subr.bf16.mxu0 %v576
  %792 = vmatpush2.bf16.msra.mxu0 %v575
  %793 = vmatprep.subr.bf16.mxu0 %v574
  %794 = vmatpush2.bf16.msra.mxu0 %v573
  %795 = vmatprep.subr.bf16.mxu0 %v572
  %796 = vmatpush2.bf16.msra.mxu0 %v571
  %797 = vmatprep.subr.bf16.mxu0 %v570
  %798 = vmatpush2.bf16.msra.mxu0 %v569
  %799 = vmatprep.subr.bf16.mxu0 %v568
  %800 = vmatpush2.bf16.msra.mxu0 %v567
  %801 = vmatprep.subr.bf16.mxu0 %v566
  %802 = vmatpush2.bf16.msra.mxu0 %v565
  %803 = vmatprep.mubr.bf16.mxu0 %v183
  %804 = vmatmul.mubr.bf16.gmra.mxu0 %v182
  %v805 = vpop.f32.mrf.mxu0
  %v806 = vadd.f32 %v763, %v805
  %v807 = vpop.f32.mrf.mxu0
  %v808 = vadd.f32 %v765, %v807
  %v809 = vpop.f32.mrf.mxu0
  %v810 = vadd.f32 %v767, %v809
  %v811 = vpop.f32.mrf.mxu0
  %v812 = vadd.f32 %v769, %v811
  %813 = vdwg.mxu0
  %814 = vmatprep.subr.bf16.mxu0 0
  %815 = vmatpush1.bf16.msra.mxu0 0
  %816 = vmatprep.subr.bf16.mxu0 0
  %817 = vmatpush1.bf16.msra.mxu0 0
  %818 = vmatprep.subr.bf16.mxu0 0
  %819 = vmatpush1.bf16.msra.mxu0 0
  %820 = vmatprep.subr.bf16.mxu0 0
  %821 = vmatpush1.bf16.msra.mxu0 0
  %822 = vmatprep.subr.bf16.mxu0 0
  %823 = vmatpush1.bf16.msra.mxu0 0
  %824 = vmatprep.subr.bf16.mxu0 0
  %825 = vmatpush1.bf16.msra.mxu0 0
  %826 = vmatprep.subr.bf16.mxu0 0
  %827 = vmatpush1.bf16.msra.mxu0 0
  %828 = vmatprep.subr.bf16.mxu0 %v582
  %829 = vmatpush1.bf16.msra.mxu0 %v581
  %830 = vmatprep.subr.bf16.mxu0 0
  %831 = vmatpush2.bf16.msra.mxu0 0
  %832 = vmatprep.subr.bf16.mxu0 0
  %833 = vmatpush2.bf16.msra.mxu0 0
  %834 = vmatprep.subr.bf16.mxu0 0
  %835 = vmatpush2.bf16.msra.mxu0 0
  %836 = vmatprep.subr.bf16.mxu0 0
  %837 = vmatpush2.bf16.msra.mxu0 0
  %838 = vmatprep.subr.bf16.mxu0 0
  %839 = vmatpush2.bf16.msra.mxu0 0
  %840 = vmatprep.subr.bf16.mxu0 0
  %841 = vmatpush2.bf16.msra.mxu0 0
  %842 = vmatprep.subr.bf16.mxu0 0
  %843 = vmatpush2.bf16.msra.mxu0 0
  %844 = vmatprep.subr.bf16.mxu0 0
  %845 = vmatpush2.bf16.msra.mxu0 0
  %846 = vmatprep.mubr.bf16.mxu0 0
  %847 = vmatmul.mubr.bf16.gmra.mxu0 %v683
  %v848 = vpop.f32.mrf.mxu0
  %v849 = vadd.f32 %v806, %v848
  %v850 = vpop.f32.mrf.mxu0
  %v851 = vadd.f32 %v808, %v850
  %v852 = vpop.f32.mrf.mxu0
  %v853 = vadd.f32 %v810, %v852
  %v854 = vpop.f32.mrf.mxu0
  %v855 = vadd.f32 %v812, %v854
  %856 = vdwg.mxu0
  %v857 = vmax.f32 %v849, 0.0
  %v858 = vmax.f32 %v851, 0.0
  %v859 = vmax.f32 %v853, 0.0
  %v860 = vmax.f32 %v855, 0.0
  %v861 = vsub.f32 0.0, %v857
  %v862 = vsub.f32 0.0, %v858
  %v863 = vsub.f32 0.0, %v859
  %v864 = vsub.f32 0.0, %v860
  %v865 = vmul.f32 %v861, 1.442695
  %v866 = vpow.pop %v865
  %v867 = vmul.f32 %v862, 1.442695
  %v868 = vpow.pop %v867
  %v869 = vmul.f32 %v863, 1.442695
  %v870 = vpow.pop %v869
  %v871 = vmul.f32 %v864, 1.442695
  %v872 = vpow.pop %v871
  %v873 = vadd.f32 %v866, 1.0
  %v874 = vadd.f32 %v868, 1.0
  %v875 = vadd.f32 %v870, 1.0
  %v876 = vadd.f32 %v872, 1.0
  %v877 = vrcp.pop %v873
  %v878 = vmul.f32 1.0, %v877
  %v879 = vrcp.pop %v874
  %v880 = vmul.f32 1.0, %v879
  %v881 = vrcp.pop %v875
  %v882 = vmul.f32 1.0, %v881
  %v883 = vrcp.pop %v876
  %v884 = vmul.f32 1.0, %v883
  %v885 = vpack.c.bf16 %v882, %v878
  %v886 = vpack.c.bf16 %v884, %v880
  %v889 = vunpack.c.l.b16 %v885
  %v890 = vunpack.c.l.b16 %v886
  %v891 = vunpack.c.h.b16 %v885
  %v892 = vunpack.c.h.b16 %v886
  %v893 = vpack.c.b16 %v890, %v889
  %v894 = vpack.c.b16 %v892, %v891
  %897 = vst [vmem:[#allocation2] sm:$0xff] %v893
  %898 = vst [vmem:[#allocation2 + $0x10] sm:$0xff] %v894
  %v899 = vpack.c.bf16 %v859, %v857
  %v900 = vpack.c.bf16 %v860, %v858
  %v903 = vunpack.c.l.b16 %v899
  %v904 = vunpack.c.l.b16 %v900
  %v905 = vunpack.c.h.b16 %v899
  %v906 = vunpack.c.h.b16 %v900
  %v907 = vpack.c.b16 %v904, %v903
  %v908 = vpack.c.b16 %v906, %v905
  %911 = vst [vmem:[#allocation2 + $0x8] sm:$0xff] %v907
  %912 = vst [vmem:[#allocation2 + $0x18] sm:$0xff] %v908
  %v913 = vld [vmem:[#allocation2] sm:$0xff]
  %v914 = vld [vmem:[#allocation2 + $0x8] sm:$0xff]
  %v915 = vld [vmem:[#allocation2 + $0x10] sm:$0xff]
  %v916 = vld [vmem:[#allocation2 + $0x18] sm:$0xff]
  %v917 = vld [vmem:[%s4] sm:$0xf]
  %v918 = vld [vmem:[%s4 + $0x4] sm:$0xf]
  %v919 = vld [vmem:[%s4 + $0x8] sm:$0xf]
  %v920 = vld [vmem:[%s4 + $0xc] sm:$0xf]
  %v921 = vld [vmem:[%s4 + $0x10] sm:$0xf]
  %v922 = vld [vmem:[%s4 + $0x14] sm:$0xf]
  %v923 = vld [vmem:[%s4 + $0x18] sm:$0xf]
  %v924 = vld [vmem:[%s4 + $0x1c] sm:$0xf]
  %v925 = vld [vmem:[%s4 + $0x20] sm:$0xf]
  %v926 = vld [vmem:[%s4 + $0x24] sm:$0xf]
  %v927 = vld [vmem:[%s4 + $0x28] sm:$0xf]
  %v928 = vld [vmem:[%s4 + $0x2c] sm:$0xf]
  %v929 = vld [vmem:[%s4 + $0x30] sm:$0xf]
  %v930 = vld [vmem:[%s4 + $0x34] sm:$0xf]
  %v931 = vld [vmem:[%s4 + $0x38] sm:$0xf]
  %v932 = vld [vmem:[%s4 + $0x3c] sm:$0xf]
  %v933 = vld [vmem:[%s4 + $0x40] sm:$0xf]
  %v934 = vld [vmem:[%s4 + $0x44] sm:$0xf]
  %v935 = vld [vmem:[%s4 + $0x48] sm:$0xf]
  %v936 = vld [vmem:[%s4 + $0x4c] sm:$0xf]
  %v937 = vld [vmem:[%s4 + $0x50] sm:$0xf]
  %v938 = vld [vmem:[%s4 + $0x54] sm:$0xf]
  %v939 = vld [vmem:[%s4 + $0x58] sm:$0xf]
  %v940 = vld [vmem:[%s4 + $0x5c] sm:$0xf]
  %v941 = vld [vmem:[%s4 + $0x60] sm:$0xf]
  %v942 = vld [vmem:[%s4 + $0x64] sm:$0xf]
  %v943 = vld [vmem:[%s4 + $0x68] sm:$0xf]
  %v944 = vld [vmem:[%s4 + $0x6c] sm:$0xf]
  %v945 = vld [vmem:[%s4 + $0x70] sm:$0xf]
  %v946 = vld [vmem:[%s4 + $0x74] sm:$0xf]
  %v947 = vld [vmem:[%s4 + $0x78] sm:$0xf]
  %v948 = vld [vmem:[%s4 + $0x7c] sm:$0xf]
  %v949 = vld [vmem:[%s4 + $0x80] sm:$0xf]
  %v950 = vld [vmem:[%s4 + $0x84] sm:$0xf]
  %v951 = vld [vmem:[%s4 + $0x88] sm:$0xf]
  %v952 = vld [vmem:[%s4 + $0x8c] sm:$0xf]
  %v953 = vld [vmem:[%s4 + $0x90] sm:$0xf]
  %v954 = vld [vmem:[%s4 + $0x94] sm:$0xf]
  %v955 = vld [vmem:[%s4 + $0x98] sm:$0xf]
  %v956 = vld [vmem:[%s4 + $0x9c] sm:$0xf]
  %v957 = vld [vmem:[%s4 + $0xa0] sm:$0xf]
  %v958 = vld [vmem:[%s4 + $0xa4] sm:$0xf]
  %v959 = vld [vmem:[%s4 + $0xa8] sm:$0xf]
  %v960 = vld [vmem:[%s4 + $0xac] sm:$0xf]
  %v961 = vld [vmem:[%s4 + $0xb0] sm:$0xf]
  %v962 = vld [vmem:[%s4 + $0xb4] sm:$0xf]
  %v963 = vld [vmem:[%s4 + $0xb8] sm:$0xf]
  %v964 = vld [vmem:[%s4 + $0xbc] sm:$0xf]
  %v965 = vld [vmem:[%s4 + $0xc0] sm:$0xf]
  %v966 = vld [vmem:[%s4 + $0xc4] sm:$0xf]
  %v967 = vld [vmem:[%s4 + $0xc8] sm:$0xf]
  %v968 = vld [vmem:[%s4 + $0xcc] sm:$0xf]
  %v969 = vld [vmem:[%s4 + $0xd0] sm:$0xf]
  %v970 = vld [vmem:[%s4 + $0xd4] sm:$0xf]
  %v971 = vld [vmem:[%s4 + $0xd8] sm:$0xf]
  %v972 = vld [vmem:[%s4 + $0xdc] sm:$0xf]
  %v973 = vld [vmem:[%s4 + $0xe0] sm:$0xf]
  %v974 = vld [vmem:[%s4 + $0xe4] sm:$0xf]
  %v975 = vld [vmem:[%s4 + $0xe8] sm:$0xf]
  %v976 = vld [vmem:[%s4 + $0xec] sm:$0xf]
  %v977 = vld [vmem:[%s4 + $0xf0] sm:$0xf]
  %v978 = vld [vmem:[%s4 + $0xf4] sm:$0xf]
  %v979 = vld [vmem:[%s4 + $0xf8] sm:$0xf]
  %v980 = vld [vmem:[%s4 + $0xfc] sm:$0xf]
  %v981 = vld [vmem:[%s5] sm:$0x1]
  %v983 = vlaneseq
  %v984 = vshrl.u32 %v983, 7
  %v985 = vsub.s32 0, %v984
  %v986 = vrot.slane %v981, %v985
  %v992 = vunpack.c.l.b16 %v913
  %v993 = vunpack.c.h.b16 %v913
  %v994 = vunpack.c.l.b16 %v914
  %v995 = vunpack.c.h.b16 %v914
  %v996 = vunpack.c.l.b16 %v915
  %v997 = vunpack.c.h.b16 %v915
  %v998 = vunpack.c.l.b16 %v916
  %v999 = vunpack.c.h.b16 %v916
  %v1000 = vpack.c.b16 %v996, %v992
  %v1001 = vpack.c.b16 %v997, %v993
  %v1002 = vpack.c.b16 %v998, %v994
  %v1003 = vpack.c.b16 %v999, %v995
  %v1072 = vunpack.c.l.b16 %v917
  %v1073 = vunpack.c.l.b16 %v918
  %v1074 = vunpack.c.l.b16 %v919
  %v1075 = vunpack.c.l.b16 %v920
  %v1076 = vunpack.c.l.b16 %v921
  %v1077 = vunpack.c.l.b16 %v922
  %v1078 = vunpack.c.l.b16 %v923
  %v1079 = vunpack.c.l.b16 %v924
  %v1080 = vunpack.c.l.b16 %v925
  %v1081 = vunpack.c.l.b16 %v926
  %v1082 = vunpack.c.l.b16 %v927
  %v1083 = vunpack.c.l.b16 %v928
  %v1084 = vunpack.c.l.b16 %v929
  %v1085 = vunpack.c.l.b16 %v930
  %v1086 = vunpack.c.l.b16 %v931
  %v1087 = vunpack.c.l.b16 %v932
  %v1088 = vunpack.c.l.b16 %v933
  %v1089 = vunpack.c.l.b16 %v934
  %v1090 = vunpack.c.l.b16 %v935
  %v1091 = vunpack.c.l.b16 %v936
  %v1092 = vunpack.c.l.b16 %v937
  %v1093 = vunpack.c.l.b16 %v938
  %v1094 = vunpack.c.l.b16 %v939
  %v1095 = vunpack.c.l.b16 %v940
  %v1096 = vunpack.c.l.b16 %v941
  %v1097 = vunpack.c.l.b16 %v942
  %v1098 = vunpack.c.l.b16 %v943
  %v1099 = vunpack.c.l.b16 %v944
  %v1100 = vunpack.c.l.b16 %v945
  %v1101 = vunpack.c.l.b16 %v946
  %v1102 = vunpack.c.l.b16 %v947
  %v1103 = vunpack.c.l.b16 %v948
  %v1104 = vunpack.c.l.b16 %v949
  %v1105 = vunpack.c.l.b16 %v950
  %v1106 = vunpack.c.l.b16 %v951
  %v1107 = vunpack.c.l.b16 %v952
  %v1108 = vunpack.c.l.b16 %v953
  %v1109 = vunpack.c.l.b16 %v954
  %v1110 = vunpack.c.l.b16 %v955
  %v1111 = vunpack.c.l.b16 %v956
  %v1112 = vunpack.c.l.b16 %v957
  %v1113 = vunpack.c.l.b16 %v958
  %v1114 = vunpack.c.l.b16 %v959
  %v1115 = vunpack.c.l.b16 %v960
  %v1116 = vunpack.c.l.b16 %v961
  %v1117 = vunpack.c.l.b16 %v962
  %v1118 = vunpack.c.l.b16 %v963
  %v1119 = vunpack.c.l.b16 %v964
  %v1120 = vunpack.c.l.b16 %v965
  %v1121 = vunpack.c.l.b16 %v966
  %v1122 = vunpack.c.l.b16 %v967
  %v1123 = vunpack.c.l.b16 %v968
  %v1124 = vunpack.c.l.b16 %v969
  %v1125 = vunpack.c.l.b16 %v970
  %v1126 = vunpack.c.l.b16 %v971
  %v1127 = vunpack.c.l.b16 %v972
  %v1128 = vunpack.c.l.b16 %v973
  %v1129 = vunpack.c.l.b16 %v974
  %v1130 = vunpack.c.l.b16 %v975
  %v1131 = vunpack.c.l.b16 %v976
  %v1132 = vunpack.c.l.b16 %v977
  %v1133 = vunpack.c.l.b16 %v978
  %v1134 = vunpack.c.l.b16 %v979
  %v1135 = vunpack.c.l.b16 %v980
  %v1136 = vpack.c.b16 %v1073, %v1072
  %v1137 = vpack.c.b16 %v1075, %v1074
  %v1138 = vpack.c.b16 %v1077, %v1076
  %v1139 = vpack.c.b16 %v1079, %v1078
  %v1140 = vpack.c.b16 %v1081, %v1080
  %v1141 = vpack.c.b16 %v1083, %v1082
  %v1142 = vpack.c.b16 %v1085, %v1084
  %v1143 = vpack.c.b16 %v1087, %v1086
  %v1144 = vpack.c.b16 %v1089, %v1088
  %v1145 = vpack.c.b16 %v1091, %v1090
  %v1146 = vpack.c.b16 %v1093, %v1092
  %v1147 = vpack.c.b16 %v1095, %v1094
  %v1148 = vpack.c.b16 %v1097, %v1096
  %v1149 = vpack.c.b16 %v1099, %v1098
  %v1150 = vpack.c.b16 %v1101, %v1100
  %v1151 = vpack.c.b16 %v1103, %v1102
  %v1152 = vpack.c.b16 %v1105, %v1104
  %v1153 = vpack.c.b16 %v1107, %v1106
  %v1154 = vpack.c.b16 %v1109, %v1108
  %v1155 = vpack.c.b16 %v1111, %v1110
  %v1156 = vpack.c.b16 %v1113, %v1112
  %v1157 = vpack.c.b16 %v1115, %v1114
  %v1158 = vpack.c.b16 %v1117, %v1116
  %v1159 = vpack.c.b16 %v1119, %v1118
  %v1160 = vpack.c.b16 %v1121, %v1120
  %v1161 = vpack.c.b16 %v1123, %v1122
  %v1162 = vpack.c.b16 %v1125, %v1124
  %v1163 = vpack.c.b16 %v1127, %v1126
  %v1164 = vpack.c.b16 %v1129, %v1128
  %v1165 = vpack.c.b16 %v1131, %v1130
  %v1166 = vpack.c.b16 %v1133, %v1132
  %v1167 = vpack.c.b16 %v1135, %v1134
  %1200 = vmatprep.subr.bf16.mxu0 0
  %1201 = vmatpush1.bf16.msra.mxu0 %v1143
  %1202 = vmatprep.subr.bf16.mxu0 0
  %1203 = vmatpush1.bf16.msra.mxu0 %v1142
  %1204 = vmatprep.subr.bf16.mxu0 0
  %1205 = vmatpush1.bf16.msra.mxu0 %v1141
  %1206 = vmatprep.subr.bf16.mxu0 0
  %1207 = vmatpush1.bf16.msra.mxu0 %v1140
  %1208 = vmatprep.subr.bf16.mxu0 0
  %1209 = vmatpush1.bf16.msra.mxu0 %v1139
  %1210 = vmatprep.subr.bf16.mxu0 0
  %1211 = vmatpush1.bf16.msra.mxu0 %v1138
  %1212 = vmatprep.subr.bf16.mxu0 0
  %1213 = vmatpush1.bf16.msra.mxu0 %v1137
  %1214 = vmatprep.subr.bf16.mxu0 0
  %1215 = vmatpush1.bf16.msra.mxu0 %v1136
  %1216 = vmatprep.subr.bf16.mxu0 0
  %1217 = vmatpush2.bf16.msra.mxu0 %v1151
  %1218 = vmatprep.subr.bf16.mxu0 0
  %1219 = vmatpush2.bf16.msra.mxu0 %v1150
  %1220 = vmatprep.subr.bf16.mxu0 0
  %1221 = vmatpush2.bf16.msra.mxu0 %v1149
  %1222 = vmatprep.subr.bf16.mxu0 0
  %1223 = vmatpush2.bf16.msra.mxu0 %v1148
  %1224 = vmatprep.subr.bf16.mxu0 0
  %1225 = vmatpush2.bf16.msra.mxu0 %v1147
  %1226 = vmatprep.subr.bf16.mxu0 0
  %1227 = vmatpush2.bf16.msra.mxu0 %v1146
  %1228 = vmatprep.subr.bf16.mxu0 0
  %1229 = vmatpush2.bf16.msra.mxu0 %v1145
  %1230 = vmatprep.subr.bf16.mxu0 0
  %1231 = vmatpush2.bf16.msra.mxu0 %v1144
  %1232 = vmatprep.mubr.bf16.mxu0 %v1001
  %1233 = vmatmul.mubr.bf16.gmra.mxu0 %v1000
  %v1234 = vpop.f32.mrf.mxu0
  %v1235 = vadd.f32 %v986, %v1234
  %v1236 = vpop.f32.mrf.mxu0
  %v1237 = vpop.f32.mrf.mxu0
  %v1238 = vadd.f32 %v986, %v1237
  %v1239 = vpop.f32.mrf.mxu0
  %1240 = vdwg.mxu0
  %1241 = vmatprep.subr.bf16.mxu0 0
  %1242 = vmatpush1.bf16.msra.mxu0 %v1159
  %1243 = vmatprep.subr.bf16.mxu0 0
  %1244 = vmatpush1.bf16.msra.mxu0 %v1158
  %1245 = vmatprep.subr.bf16.mxu0 0
  %1246 = vmatpush1.bf16.msra.mxu0 %v1157
  %1247 = vmatprep.subr.bf16.mxu0 0
  %1248 = vmatpush1.bf16.msra.mxu0 %v1156
  %1249 = vmatprep.subr.bf16.mxu0 0
  %1250 = vmatpush1.bf16.msra.mxu0 %v1155
  %1251 = vmatprep.subr.bf16.mxu0 0
  %1252 = vmatpush1.bf16.msra.mxu0 %v1154
  %1253 = vmatprep.subr.bf16.mxu0 0
  %1254 = vmatpush1.bf16.msra.mxu0 %v1153
  %1255 = vmatprep.subr.bf16.mxu0 0
  %1256 = vmatpush1.bf16.msra.mxu0 %v1152
  %1257 = vmatprep.subr.bf16.mxu0 0
  %1258 = vmatpush2.bf16.msra.mxu0 %v1167
  %1259 = vmatprep.subr.bf16.mxu0 0
  %1260 = vmatpush2.bf16.msra.mxu0 %v1166
  %1261 = vmatprep.subr.bf16.mxu0 0
  %1262 = vmatpush2.bf16.msra.mxu0 %v1165
  %1263 = vmatprep.subr.bf16.mxu0 0
  %1264 = vmatpush2.bf16.msra.mxu0 %v1164
  %1265 = vmatprep.subr.bf16.mxu0 0
  %1266 = vmatpush2.bf16.msra.mxu0 %v1163
  %1267 = vmatprep.subr.bf16.mxu0 0
  %1268 = vmatpush2.bf16.msra.mxu0 %v1162
  %1269 = vmatprep.subr.bf16.mxu0 0
  %1270 = vmatpush2.bf16.msra.mxu0 %v1161
  %1271 = vmatprep.subr.bf16.mxu0 0
  %1272 = vmatpush2.bf16.msra.mxu0 %v1160
  %1273 = vmatprep.mubr.bf16.mxu0 %v1003
  %1274 = vmatmul.mubr.bf16.gmra.mxu0 %v1002
  %v1275 = vpop.f32.mrf.mxu0
  %v1276 = vadd.f32 %v1235, %v1275
  %v1277 = vpop.f32.mrf.mxu0
  %v1278 = vpop.f32.mrf.mxu0
  %v1279 = vadd.f32 %v1238, %v1278
  %v1280 = vpop.f32.mrf.mxu0
  %1281 = vdwg.mxu0
  %1282 = vst [vmem:[%s11] sm:$0xff] %v1276
  %1283 = vst [vmem:[%s11 + $0x8] sm:$0xff] %v1279
  %v1284 = vld [vmem:[%s1] sm:$0xff]
  %v1285 = vld [vmem:[%s1 + $0x8] sm:$0xff]
  %1288 = vrot.lane.b32.xlu0 %v1284, 32
  %v1289 = vpop.permute.xlu0 %1288
  %1290 = vrot.lane.b32.xlu0 %v1285, 32
  %v1291 = vpop.permute.xlu0 %1290
  %v1294 = vmul.f32 %v1276, %v1289
  %v1295 = vmul.f32 %v1279, %v1291
  %1298 = vrot.lane.b32.xlu0 %v1294, 96
  %v1299 = vpop.permute.xlu0 %1298
  %1300 = vrot.lane.b32.xlu0 %v1295, 96
  %v1301 = vpop.permute.xlu0 %1300
  %v1304 = vadd.f32 %v1276, %v1299
  %v1305 = vadd.f32 %v1279, %v1301
  %v1306 = vpack.c.bf16 %v1305, %v1304
  %v1307 = vld [vmem:[%s6] sm:$0xff]
  %v1308 = vld [vmem:[%s6 + $0x8] sm:$0xff]
  %v1309 = vld [vmem:[%s6 + $0x10] sm:$0xff]
  %v1310 = vld [vmem:[%s6 + $0x18] sm:$0xff]
  %v1311 = vld [vmem:[%s7] sm:$0x3]
  %v1313 = vlaneseq
  %v1314 = vshrl.u32 %v1313, 7
  %v1315 = vsub.s32 0, %v1314
  %v1316 = vrot.slane %v1311, %v1315
  %v1317 = vlaneseq
  %v1318 = vshrl.u32 %v1317, 7
  %v1319 = vsub.s32 1, %v1318
  %v1320 = vrot.slane %v1311, %v1319
  %v1327 = vunpack.c.l.b16 %v1307
  %v1328 = vunpack.c.h.b16 %v1307
  %v1329 = vunpack.c.l.b16 %v1308
  %v1330 = vunpack.c.h.b16 %v1308
  %v1331 = vunpack.c.l.b16 %v1309
  %v1332 = vunpack.c.h.b16 %v1309
  %v1333 = vunpack.c.l.b16 %v1310
  %v1334 = vunpack.c.h.b16 %v1310
  %v1335 = vpack.c.b16 %v1329, %v1327
  %v1336 = vpack.c.b16 %v1330, %v1328
  %v1337 = vpack.c.b16 %v1333, %v1331
  %v1338 = vpack.c.b16 %v1334, %v1332
  %vm1343 = vcmask 261120
  %v1345 = vsel %vm1343, %v1306, 0
  %1347 = vmatprep.subr.bf16.mxu0 0
  %1348 = vmatpush1.bf16.msra.mxu0 0
  %1349 = vmatprep.subr.bf16.mxu0 0
  %1350 = vmatpush1.bf16.msra.mxu0 0
  %1351 = vmatprep.subr.bf16.mxu0 0
  %1352 = vmatpush1.bf16.msra.mxu0 0
  %1353 = vmatprep.subr.bf16.mxu0 0
  %1354 = vmatpush1.bf16.msra.mxu0 0
  %1355 = vmatprep.subr.bf16.mxu0 0
  %1356 = vmatpush1.bf16.msra.mxu0 0
  %1357 = vmatprep.subr.bf16.mxu0 0
  %1358 = vmatpush1.bf16.msra.mxu0 0
  %1359 = vmatprep.subr.bf16.mxu0 %v1338
  %1360 = vmatpush1.bf16.msra.mxu0 %v1337
  %1361 = vmatprep.subr.bf16.mxu0 %v1336
  %1362 = vmatpush1.bf16.msra.mxu0 %v1335
  %1363 = vmatprep.subr.bf16.mxu0 0
  %1364 = vmatpush2.bf16.msra.mxu0 0
  %1365 = vmatprep.subr.bf16.mxu0 0
  %1366 = vmatpush2.bf16.msra.mxu0 0
  %1367 = vmatprep.subr.bf16.mxu0 0
  %1368 = vmatpush2.bf16.msra.mxu0 0
  %1369 = vmatprep.subr.bf16.mxu0 0
  %1370 = vmatpush2.bf16.msra.mxu0 0
  %1371 = vmatprep.subr.bf16.mxu0 0
  %1372 = vmatpush2.bf16.msra.mxu0 0
  %1373 = vmatprep.subr.bf16.mxu0 0
  %1374 = vmatpush2.bf16.msra.mxu0 0
  %1375 = vmatprep.subr.bf16.mxu0 0
  %1376 = vmatpush2.bf16.msra.mxu0 0
  %1377 = vmatprep.subr.bf16.mxu0 0
  %1378 = vmatpush2.bf16.msra.mxu0 0
  %1379 = vmatprep.mubr.bf16.mxu0 0
  %1380 = vmatmul.mubr.bf16.gmra.mxu0 %v1345
  %v1381 = vpop.f32.mrf.mxu0
  %v1382 = vadd.f32 %v1316, %v1381
  %v1383 = vpop.f32.mrf.mxu0
  %v1384 = vadd.f32 %v1320, %v1383
  %v1385 = vpop.f32.mrf.mxu0
  %v1386 = vadd.f32 %v1316, %v1385
  %v1387 = vpop.f32.mrf.mxu0
  %v1388 = vadd.f32 %v1320, %v1387
  %1389 = vdwg.mxu0
  %v1390 = vmax.f32 %v1382, 0.0
  %v1391 = vmax.f32 %v1384, 0.0
  %v1392 = vmax.f32 %v1386, 0.0
  %v1393 = vmax.f32 %v1388, 0.0
  %v1394 = vpack.c.bf16 %v1392, %v1390
  %v1395 = vpack.c.bf16 %v1393, %v1391
  %v1396 = vld [vmem:[%s8] sm:$0xff]
  %v1397 = vld [vmem:[%s8 + $0x8] sm:$0xff]
  %v1398 = vld [vmem:[%s8 + $0x10] sm:$0xff]
  %v1399 = vld [vmem:[%s8 + $0x18] sm:$0xf]
  %v1400 = vld [vmem:[%s8 + $0x1c] sm:$0xff]
  %v1401 = vld [vmem:[%s8 + $0x24] sm:$0xff]
  %v1402 = vld [vmem:[%s8 + $0x2c] sm:$0xff]
  %v1403 = vld [vmem:[%s8 + $0x34] sm:$0xf]
  %v1404 = vld [vmem:[%s8 + $0x38] sm:$0xff]
  %v1405 = vld [vmem:[%s8 + $0x40] sm:$0xff]
  %v1406 = vld [vmem:[%s8 + $0x48] sm:$0xff]
  %v1407 = vld [vmem:[%s8 + $0x50] sm:$0xf]
  %v1408 = vld [vmem:[%s8 + $0x54] sm:$0xff]
  %v1409 = vld [vmem:[%s8 + $0x5c] sm:$0xff]
  %v1410 = vld [vmem:[%s8 + $0x64] sm:$0xff]
  %v1411 = vld [vmem:[%s8 + $0x6c] sm:$0xf]
  %v1412 = vld [vmem:[%s8 + $0x70] sm:$0xff]
  %v1413 = vld [vmem:[%s8 + $0x78] sm:$0xff]
  %v1414 = vld [vmem:[%s8 + $0x80] sm:$0xff]
  %v1415 = vld [vmem:[%s8 + $0x88] sm:$0xf]
  %v1416 = vld [vmem:[%s8 + $0x8c] sm:$0xff]
  %v1417 = vld [vmem:[%s8 + $0x94] sm:$0xff]
  %v1418 = vld [vmem:[%s8 + $0x9c] sm:$0xff]
  %v1419 = vld [vmem:[%s8 + $0xa4] sm:$0xf]
  %v1420 = vld [vmem:[%s8 + $0xa8] sm:$0xff]
  %v1421 = vld [vmem:[%s8 + $0xb0] sm:$0xff]
  %v1422 = vld [vmem:[%s8 + $0xb8] sm:$0xff]
  %v1423 = vld [vmem:[%s8 + $0xc0] sm:$0xf]
  %v1424 = vld [vmem:[%s8 + $0xc4] sm:$0xff]
  %v1425 = vld [vmem:[%s8 + $0xcc] sm:$0xff]
  %v1426 = vld [vmem:[%s8 + $0xd4] sm:$0xff]
  %v1427 = vld [vmem:[%s8 + $0xdc] sm:$0xf]
  %v1428 = vld [vmem:[%s8 + $0xe0] sm:$0xff]
  %v1429 = vld [vmem:[%s8 + $0xe8] sm:$0xff]
  %v1430 = vld [vmem:[%s8 + $0xf0] sm:$0xff]
  %v1431 = vld [vmem:[%s8 + $0xf8] sm:$0xf]
  %v1432 = vld [vmem:[%s8 + $0xfc] sm:$0xff]
  %v1433 = vld [vmem:[%s8 + $0x104] sm:$0xff]
  %v1434 = vld [vmem:[%s8 + $0x10c] sm:$0xff]
  %v1435 = vld [vmem:[%s8 + $0x114] sm:$0xf]
  %v1436 = vld [vmem:[%s8 + $0x118] sm:$0xff]
  %v1437 = vld [vmem:[%s8 + $0x120] sm:$0xff]
  %v1438 = vld [vmem:[%s8 + $0x128] sm:$0xff]
  %v1439 = vld [vmem:[%s8 + $0x130] sm:$0xf]
  %v1440 = vld [vmem:[%s8 + $0x134] sm:$0xff]
  %v1441 = vld [vmem:[%s8 + $0x13c] sm:$0xff]
  %v1442 = vld [vmem:[%s8 + $0x144] sm:$0xff]
  %v1443 = vld [vmem:[%s8 + $0x14c] sm:$0xf]
  %v1444 = vld [vmem:[%s8 + $0x150] sm:$0xff]
  %v1445 = vld [vmem:[%s8 + $0x158] sm:$0xff]
  %v1446 = vld [vmem:[%s8 + $0x160] sm:$0xff]
  %v1447 = vld [vmem:[%s8 + $0x168] sm:$0xf]
  %v1448 = vld [vmem:[%s8 + $0x16c] sm:$0xff]
  %v1449 = vld [vmem:[%s8 + $0x174] sm:$0xff]
  %v1450 = vld [vmem:[%s8 + $0x17c] sm:$0xff]
  %v1451 = vld [vmem:[%s8 + $0x184] sm:$0xf]
  %v1452 = vld [vmem:[%s8 + $0x188] sm:$0xff]
  %v1453 = vld [vmem:[%s8 + $0x190] sm:$0xff]
  %v1454 = vld [vmem:[%s8 + $0x198] sm:$0xff]
  %v1455 = vld [vmem:[%s8 + $0x1a0] sm:$0xf]
  %v1456 = vld [vmem:[%s8 + $0x1a4] sm:$0xff]
  %v1457 = vld [vmem:[%s8 + $0x1ac] sm:$0xff]
  %v1458 = vld [vmem:[%s8 + $0x1b4] sm:$0xff]
  %v1459 = vld [vmem:[%s8 + $0x1bc] sm:$0xf]
  %v1460 = vld [vmem:[%s8 + $0x1c0] sm:$0xff]
  %v1461 = vld [vmem:[%s8 + $0x1c8] sm:$0xff]
  %v1462 = vld [vmem:[%s8 + $0x1d0] sm:$0xff]
  %v1463 = vld [vmem:[%s8 + $0x1d8] sm:$0xf]
  %v1464 = vld [vmem:[%s8 + $0x1dc] sm:$0xff]
  %v1465 = vld [vmem:[%s8 + $0x1e4] sm:$0xff]
  %v1466 = vld [vmem:[%s8 + $0x1ec] sm:$0xff]
  %v1467 = vld [vmem:[%s8 + $0x1f4] sm:$0xf]
  %v1468 = vld [vmem:[%s8 + $0x1f8] sm:$0xff]
  %v1469 = vld [vmem:[%s8 + $0x200] sm:$0xff]
  %v1470 = vld [vmem:[%s8 + $0x208] sm:$0xff]
  %v1471 = vld [vmem:[%s8 + $0x210] sm:$0xf]
  %v1472 = vld [vmem:[%s8 + $0x214] sm:$0xff]
  %v1473 = vld [vmem:[%s8 + $0x21c] sm:$0xff]
  %v1474 = vld [vmem:[%s8 + $0x224] sm:$0xff]
  %v1475 = vld [vmem:[%s8 + $0x22c] sm:$0xf]
  %v1476 = vld [vmem:[%s8 + $0x230] sm:$0xff]
  %v1477 = vld [vmem:[%s8 + $0x238] sm:$0xff]
  %v1478 = vld [vmem:[%s8 + $0x240] sm:$0xff]
  %v1479 = vld [vmem:[%s8 + $0x248] sm:$0xf]
  %v1480 = vld [vmem:[%s8 + $0x24c] sm:$0xff]
  %v1481 = vld [vmem:[%s8 + $0x254] sm:$0xff]
  %v1482 = vld [vmem:[%s8 + $0x25c] sm:$0xff]
  %v1483 = vld [vmem:[%s8 + $0x264] sm:$0xf]
  %v1484 = vld [vmem:[%s8 + $0x268] sm:$0xff]
  %v1485 = vld [vmem:[%s8 + $0x270] sm:$0xff]
  %v1486 = vld [vmem:[%s8 + $0x278] sm:$0xff]
  %v1487 = vld [vmem:[%s8 + $0x280] sm:$0xf]
  %v1488 = vld [vmem:[%s8 + $0x284] sm:$0xff]
  %v1489 = vld [vmem:[%s8 + $0x28c] sm:$0xff]
  %v1490 = vld [vmem:[%s8 + $0x294] sm:$0xff]
  %v1491 = vld [vmem:[%s8 + $0x29c] sm:$0xf]
  %v1492 = vld [vmem:[%s8 + $0x2a0] sm:$0xff]
  %v1493 = vld [vmem:[%s8 + $0x2a8] sm:$0xff]
  %v1494 = vld [vmem:[%s8 + $0x2b0] sm:$0xff]
  %v1495 = vld [vmem:[%s8 + $0x2b8] sm:$0xf]
  %v1496 = vld [vmem:[%s8 + $0x2bc] sm:$0xff]
  %v1497 = vld [vmem:[%s8 + $0x2c4] sm:$0xff]
  %v1498 = vld [vmem:[%s8 + $0x2cc] sm:$0xff]
  %v1499 = vld [vmem:[%s8 + $0x2d4] sm:$0xf]
  %v1500 = vld [vmem:[%s8 + $0x2d8] sm:$0xff]
  %v1501 = vld [vmem:[%s8 + $0x2e0] sm:$0xff]
  %v1502 = vld [vmem:[%s8 + $0x2e8] sm:$0xff]
  %v1503 = vld [vmem:[%s8 + $0x2f0] sm:$0xf]
  %v1504 = vld [vmem:[%s8 + $0x2f4] sm:$0xff]
  %v1505 = vld [vmem:[%s8 + $0x2fc] sm:$0xff]
  %v1506 = vld [vmem:[%s8 + $0x304] sm:$0xff]
  %v1507 = vld [vmem:[%s8 + $0x30c] sm:$0xf]
  %v1508 = vld [vmem:[%s8 + $0x310] sm:$0xff]
  %v1509 = vld [vmem:[%s8 + $0x318] sm:$0xff]
  %v1510 = vld [vmem:[%s8 + $0x320] sm:$0xff]
  %v1511 = vld [vmem:[%s8 + $0x328] sm:$0xf]
  %v1512 = vld [vmem:[%s8 + $0x32c] sm:$0xff]
  %v1513 = vld [vmem:[%s8 + $0x334] sm:$0xff]
  %v1514 = vld [vmem:[%s8 + $0x33c] sm:$0xff]
  %v1515 = vld [vmem:[%s8 + $0x344] sm:$0xf]
  %v1516 = vld [vmem:[%s8 + $0x348] sm:$0xff]
  %v1517 = vld [vmem:[%s8 + $0x350] sm:$0xff]
  %v1518 = vld [vmem:[%s8 + $0x358] sm:$0xff]
  %v1519 = vld [vmem:[%s8 + $0x360] sm:$0xf]
  %v1520 = vld [vmem:[%s8 + $0x364] sm:$0xff]
  %v1521 = vld [vmem:[%s8 + $0x36c] sm:$0xff]
  %v1522 = vld [vmem:[%s8 + $0x374] sm:$0xff]
  %v1523 = vld [vmem:[%s8 + $0x37c] sm:$0xf]
  %v1524 = vld [vmem:[%s9] sm:$0x7f]
  %v1526 = vlaneseq
  %v1527 = vshrl.u32 %v1526, 7
  %v1528 = vsub.s32 0, %v1527
  %v1529 = vrot.slane %v1524, %v1528
  %v1530 = vlaneseq
  %v1531 = vshrl.u32 %v1530, 7
  %v1532 = vsub.s32 1, %v1531
  %v1533 = vrot.slane %v1524, %v1532
  %v1534 = vlaneseq
  %v1535 = vshrl.u32 %v1534, 7
  %v1536 = vsub.s32 2, %v1535
  %v1537 = vrot.slane %v1524, %v1536
  %v1538 = vlaneseq
  %v1539 = vshrl.u32 %v1538, 7
  %v1540 = vsub.s32 3, %v1539
  %v1541 = vrot.slane %v1524, %v1540
  %v1542 = vlaneseq
  %v1543 = vshrl.u32 %v1542, 7
  %v1544 = vsub.s32 4, %v1543
  %v1545 = vrot.slane %v1524, %v1544
  %v1546 = vlaneseq
  %v1547 = vshrl.u32 %v1546, 7
  %v1548 = vsub.s32 5, %v1547
  %v1549 = vrot.slane %v1524, %v1548
  %v1550 = vlaneseq
  %v1551 = vshrl.u32 %v1550, 7
  %v1552 = vsub.s32 6, %v1551
  %v1553 = vrot.slane %v1524, %v1552
  %v1689 = vunpack.c.l.b16 %v1396
  %v1690 = vunpack.c.h.b16 %v1396
  %v1691 = vunpack.c.l.b16 %v1397
  %v1692 = vunpack.c.h.b16 %v1397
  %v1693 = vunpack.c.l.b16 %v1398
  %v1694 = vunpack.c.h.b16 %v1398
  %v1695 = vunpack.c.l.b16 %v1399
  %v1696 = vunpack.c.l.b16 %v1400
  %v1697 = vunpack.c.h.b16 %v1400
  %v1698 = vunpack.c.l.b16 %v1401
  %v1699 = vunpack.c.h.b16 %v1401
  %v1700 = vunpack.c.l.b16 %v1402
  %v1701 = vunpack.c.h.b16 %v1402
  %v1702 = vunpack.c.l.b16 %v1403
  %v1703 = vunpack.c.l.b16 %v1404
  %v1704 = vunpack.c.h.b16 %v1404
  %v1705 = vunpack.c.l.b16 %v1405
  %v1706 = vunpack.c.h.b16 %v1405
  %v1707 = vunpack.c.l.b16 %v1406
  %v1708 = vunpack.c.h.b16 %v1406
  %v1709 = vunpack.c.l.b16 %v1407
  %v1710 = vunpack.c.l.b16 %v1408
  %v1711 = vunpack.c.h.b16 %v1408
  %v1712 = vunpack.c.l.b16 %v1409
  %v1713 = vunpack.c.h.b16 %v1409
  %v1714 = vunpack.c.l.b16 %v1410
  %v1715 = vunpack.c.h.b16 %v1410
  %v1716 = vunpack.c.l.b16 %v1411
  %v1717 = vunpack.c.l.b16 %v1412
  %v1718 = vunpack.c.h.b16 %v1412
  %v1719 = vunpack.c.l.b16 %v1413
  %v1720 = vunpack.c.h.b16 %v1413
  %v1721 = vunpack.c.l.b16 %v1414
  %v1722 = vunpack.c.h.b16 %v1414
  %v1723 = vunpack.c.l.b16 %v1415
  %v1724 = vunpack.c.l.b16 %v1416
  %v1725 = vunpack.c.h.b16 %v1416
  %v1726 = vunpack.c.l.b16 %v1417
  %v1727 = vunpack.c.h.b16 %v1417
  %v1728 = vunpack.c.l.b16 %v1418
  %v1729 = vunpack.c.h.b16 %v1418
  %v1730 = vunpack.c.l.b16 %v1419
  %v1731 = vunpack.c.l.b16 %v1420
  %v1732 = vunpack.c.h.b16 %v1420
  %v1733 = vunpack.c.l.b16 %v1421
  %v1734 = vunpack.c.h.b16 %v1421
  %v1735 = vunpack.c.l.b16 %v1422
  %v1736 = vunpack.c.h.b16 %v1422
  %v1737 = vunpack.c.l.b16 %v1423
  %v1738 = vunpack.c.l.b16 %v1424
  %v1739 = vunpack.c.h.b16 %v1424
  %v1740 = vunpack.c.l.b16 %v1425
  %v1741 = vunpack.c.h.b16 %v1425
  %v1742 = vunpack.c.l.b16 %v1426
  %v1743 = vunpack.c.h.b16 %v1426
  %v1744 = vunpack.c.l.b16 %v1427
  %v1745 = vunpack.c.l.b16 %v1428
  %v1746 = vunpack.c.h.b16 %v1428
  %v1747 = vunpack.c.l.b16 %v1429
  %v1748 = vunpack.c.h.b16 %v1429
  %v1749 = vunpack.c.l.b16 %v1430
  %v1750 = vunpack.c.h.b16 %v1430
  %v1751 = vunpack.c.l.b16 %v1431
  %v1752 = vunpack.c.l.b16 %v1432
  %v1753 = vunpack.c.h.b16 %v1432
  %v1754 = vunpack.c.l.b16 %v1433
  %v1755 = vunpack.c.h.b16 %v1433
  %v1756 = vunpack.c.l.b16 %v1434
  %v1757 = vunpack.c.h.b16 %v1434
  %v1758 = vunpack.c.l.b16 %v1435
  %v1759 = vunpack.c.l.b16 %v1436
  %v1760 = vunpack.c.h.b16 %v1436
  %v1761 = vunpack.c.l.b16 %v1437
  %v1762 = vunpack.c.h.b16 %v1437
  %v1763 = vunpack.c.l.b16 %v1438
  %v1764 = vunpack.c.h.b16 %v1438
  %v1765 = vunpack.c.l.b16 %v1439
  %v1766 = vunpack.c.l.b16 %v1440
  %v1767 = vunpack.c.h.b16 %v1440
  %v1768 = vunpack.c.l.b16 %v1441
  %v1769 = vunpack.c.h.b16 %v1441
  %v1770 = vunpack.c.l.b16 %v1442
  %v1771 = vunpack.c.h.b16 %v1442
  %v1772 = vunpack.c.l.b16 %v1443
  %v1773 = vunpack.c.l.b16 %v1444
  %v1774 = vunpack.c.h.b16 %v1444
  %v1775 = vunpack.c.l.b16 %v1445
  %v1776 = vunpack.c.h.b16 %v1445
  %v1777 = vunpack.c.l.b16 %v1446
  %v1778 = vunpack.c.h.b16 %v1446
  %v1779 = vunpack.c.l.b16 %v1447
  %v1780 = vunpack.c.l.b16 %v1448
  %v1781 = vunpack.c.h.b16 %v1448
  %v1782 = vunpack.c.l.b16 %v1449
  %v1783 = vunpack.c.h.b16 %v1449
  %v1784 = vunpack.c.l.b16 %v1450
  %v1785 = vunpack.c.h.b16 %v1450
  %v1786 = vunpack.c.l.b16 %v1451
  %v1787 = vunpack.c.l.b16 %v1452
  %v1788 = vunpack.c.h.b16 %v1452
  %v1789 = vunpack.c.l.b16 %v1453
  %v1790 = vunpack.c.h.b16 %v1453
  %v1791 = vunpack.c.l.b16 %v1454
  %v1792 = vunpack.c.h.b16 %v1454
  %v1793 = vunpack.c.l.b16 %v1455
  %v1794 = vunpack.c.l.b16 %v1456
  %v1795 = vunpack.c.h.b16 %v1456
  %v1796 = vunpack.c.l.b16 %v1457
  %v1797 = vunpack.c.h.b16 %v1457
  %v1798 = vunpack.c.l.b16 %v1458
  %v1799 = vunpack.c.h.b16 %v1458
  %v1800 = vunpack.c.l.b16 %v1459
  %v1801 = vunpack.c.l.b16 %v1460
  %v1802 = vunpack.c.h.b16 %v1460
  %v1803 = vunpack.c.l.b16 %v1461
  %v1804 = vunpack.c.h.b16 %v1461
  %v1805 = vunpack.c.l.b16 %v1462
  %v1806 = vunpack.c.h.b16 %v1462
  %v1807 = vunpack.c.l.b16 %v1463
  %v1808 = vunpack.c.l.b16 %v1464
  %v1809 = vunpack.c.h.b16 %v1464
  %v1810 = vunpack.c.l.b16 %v1465
  %v1811 = vunpack.c.h.b16 %v1465
  %v1812 = vunpack.c.l.b16 %v1466
  %v1813 = vunpack.c.h.b16 %v1466
  %v1814 = vunpack.c.l.b16 %v1467
  %v1815 = vunpack.c.l.b16 %v1468
  %v1816 = vunpack.c.h.b16 %v1468
  %v1817 = vunpack.c.l.b16 %v1469
  %v1818 = vunpack.c.h.b16 %v1469
  %v1819 = vunpack.c.l.b16 %v1470
  %v1820 = vunpack.c.h.b16 %v1470
  %v1821 = vunpack.c.l.b16 %v1471
  %v1822 = vunpack.c.l.b16 %v1472
  %v1823 = vunpack.c.h.b16 %v1472
  %v1824 = vunpack.c.l.b16 %v1473
  %v1825 = vunpack.c.h.b16 %v1473
  %v1826 = vunpack.c.l.b16 %v1474
  %v1827 = vunpack.c.h.b16 %v1474
  %v1828 = vunpack.c.l.b16 %v1475
  %v1829 = vunpack.c.l.b16 %v1476
  %v1830 = vunpack.c.h.b16 %v1476
  %v1831 = vunpack.c.l.b16 %v1477
  %v1832 = vunpack.c.h.b16 %v1477
  %v1833 = vunpack.c.l.b16 %v1478
  %v1834 = vunpack.c.h.b16 %v1478
  %v1835 = vunpack.c.l.b16 %v1479
  %v1836 = vunpack.c.l.b16 %v1480
  %v1837 = vunpack.c.h.b16 %v1480
  %v1838 = vunpack.c.l.b16 %v1481
  %v1839 = vunpack.c.h.b16 %v1481
  %v1840 = vunpack.c.l.b16 %v1482
  %v1841 = vunpack.c.h.b16 %v1482
  %v1842 = vunpack.c.l.b16 %v1483
  %v1843 = vunpack.c.l.b16 %v1484
  %v1844 = vunpack.c.h.b16 %v1484
  %v1845 = vunpack.c.l.b16 %v1485
  %v1846 = vunpack.c.h.b16 %v1485
  %v1847 = vunpack.c.l.b16 %v1486
  %v1848 = vunpack.c.h.b16 %v1486
  %v1849 = vunpack.c.l.b16 %v1487
  %v1850 = vunpack.c.l.b16 %v1488
  %v1851 = vunpack.c.h.b16 %v1488
  %v1852 = vunpack.c.l.b16 %v1489
  %v1853 = vunpack.c.h.b16 %v1489
  %v1854 = vunpack.c.l.b16 %v1490
  %v1855 = vunpack.c.h.b16 %v1490
  %v1856 = vunpack.c.l.b16 %v1491
  %v1857 = vunpack.c.l.b16 %v1492
  %v1858 = vunpack.c.h.b16 %v1492
  %v1859 = vunpack.c.l.b16 %v1493
  %v1860 = vunpack.c.h.b16 %v1493
  %v1861 = vunpack.c.l.b16 %v1494
  %v1862 = vunpack.c.h.b16 %v1494
  %v1863 = vunpack.c.l.b16 %v1495
  %v1864 = vunpack.c.l.b16 %v1496
  %v1865 = vunpack.c.h.b16 %v1496
  %v1866 = vunpack.c.l.b16 %v1497
  %v1867 = vunpack.c.h.b16 %v1497
  %v1868 = vunpack.c.l.b16 %v1498
  %v1869 = vunpack.c.h.b16 %v1498
  %v1870 = vunpack.c.l.b16 %v1499
  %v1871 = vunpack.c.l.b16 %v1500
  %v1872 = vunpack.c.h.b16 %v1500
  %v1873 = vunpack.c.l.b16 %v1501
  %v1874 = vunpack.c.h.b16 %v1501
  %v1875 = vunpack.c.l.b16 %v1502
  %v1876 = vunpack.c.h.b16 %v1502
  %v1877 = vunpack.c.l.b16 %v1503
  %v1878 = vunpack.c.l.b16 %v1504
  %v1879 = vunpack.c.h.b16 %v1504
  %v1880 = vunpack.c.l.b16 %v1505
  %v1881 = vunpack.c.h.b16 %v1505
  %v1882 = vunpack.c.l.b16 %v1506
  %v1883 = vunpack.c.h.b16 %v1506
  %v1884 = vunpack.c.l.b16 %v1507
  %v1885 = vunpack.c.l.b16 %v1508
  %v1886 = vunpack.c.h.b16 %v1508
  %v1887 = vunpack.c.l.b16 %v1509
  %v1888 = vunpack.c.h.b16 %v1509
  %v1889 = vunpack.c.l.b16 %v1510
  %v1890 = vunpack.c.h.b16 %v1510
  %v1891 = vunpack.c.l.b16 %v1511
  %v1892 = vunpack.c.l.b16 %v1512
  %v1893 = vunpack.c.h.b16 %v1512
  %v1894 = vunpack.c.l.b16 %v1513
  %v1895 = vunpack.c.h.b16 %v1513
  %v1896 = vunpack.c.l.b16 %v1514
  %v1897 = vunpack.c.h.b16 %v1514
  %v1898 = vunpack.c.l.b16 %v1515
  %v1899 = vunpack.c.l.b16 %v1516
  %v1900 = vunpack.c.h.b16 %v1516
  %v1901 = vunpack.c.l.b16 %v1517
  %v1902 = vunpack.c.h.b16 %v1517
  %v1903 = vunpack.c.l.b16 %v1518
  %v1904 = vunpack.c.h.b16 %v1518
  %v1905 = vunpack.c.l.b16 %v1519
  %v1906 = vunpack.c.l.b16 %v1520
  %v1907 = vunpack.c.h.b16 %v1520
  %v1908 = vunpack.c.l.b16 %v1521
  %v1909 = vunpack.c.h.b16 %v1521
  %v1910 = vunpack.c.l.b16 %v1522
  %v1911 = vunpack.c.h.b16 %v1522
  %v1912 = vunpack.c.l.b16 %v1523
  %v1913 = vpack.c.b16 %v1696, %v1689
  %v1914 = vpack.c.b16 %v1697, %v1690
  %v1915 = vpack.c.b16 %v1698, %v1691
  %v1916 = vpack.c.b16 %v1699, %v1692
  %v1917 = vpack.c.b16 %v1700, %v1693
  %v1918 = vpack.c.b16 %v1701, %v1694
  %v1919 = vpack.c.b16 %v1702, %v1695
  %v1920 = vpack.c.b16 %v1710, %v1703
  %v1921 = vpack.c.b16 %v1711, %v1704
  %v1922 = vpack.c.b16 %v1712, %v1705
  %v1923 = vpack.c.b16 %v1713, %v1706
  %v1924 = vpack.c.b16 %v1714, %v1707
  %v1925 = vpack.c.b16 %v1715, %v1708
  %v1926 = vpack.c.b16 %v1716, %v1709
  %v1927 = vpack.c.b16 %v1724, %v1717
  %v1928 = vpack.c.b16 %v1725, %v1718
  %v1929 = vpack.c.b16 %v1726, %v1719
  %v1930 = vpack.c.b16 %v1727, %v1720
  %v1931 = vpack.c.b16 %v1728, %v1721
  %v1932 = vpack.c.b16 %v1729, %v1722
  %v1933 = vpack.c.b16 %v1730, %v1723
  %v1934 = vpack.c.b16 %v1738, %v1731
  %v1935 = vpack.c.b16 %v1739, %v1732
  %v1936 = vpack.c.b16 %v1740, %v1733
  %v1937 = vpack.c.b16 %v1741, %v1734
  %v1938 = vpack.c.b16 %v1742, %v1735
  %v1939 = vpack.c.b16 %v1743, %v1736
  %v1940 = vpack.c.b16 %v1744, %v1737
  %v1941 = vpack.c.b16 %v1752, %v1745
  %v1942 = vpack.c.b16 %v1753, %v1746
  %v1943 = vpack.c.b16 %v1754, %v1747
  %v1944 = vpack.c.b16 %v1755, %v1748
  %v1945 = vpack.c.b16 %v1756, %v1749
  %v1946 = vpack.c.b16 %v1757, %v1750
  %v1947 = vpack.c.b16 %v1758, %v1751
  %v1948 = vpack.c.b16 %v1766, %v1759
  %v1949 = vpack.c.b16 %v1767, %v1760
  %v1950 = vpack.c.b16 %v1768, %v1761
  %v1951 = vpack.c.b16 %v1769, %v1762
  %v1952 = vpack.c.b16 %v1770, %v1763
  %v1953 = vpack.c.b16 %v1771, %v1764
  %v1954 = vpack.c.b16 %v1772, %v1765
  %v1955 = vpack.c.b16 %v1780, %v1773
  %v1956 = vpack.c.b16 %v1781, %v1774
  %v1957 = vpack.c.b16 %v1782, %v1775
  %v1958 = vpack.c.b16 %v1783, %v1776
  %v1959 = vpack.c.b16 %v1784, %v1777
  %v1960 = vpack.c.b16 %v1785, %v1778
  %v1961 = vpack.c.b16 %v1786, %v1779
  %v1962 = vpack.c.b16 %v1794, %v1787
  %v1963 = vpack.c.b16 %v1795, %v1788
  %v1964 = vpack.c.b16 %v1796, %v1789
  %v1965 = vpack.c.b16 %v1797, %v1790
  %v1966 = vpack.c.b16 %v1798, %v1791
  %v1967 = vpack.c.b16 %v1799, %v1792
  %v1968 = vpack.c.b16 %v1800, %v1793
  %v1969 = vpack.c.b16 %v1808, %v1801
  %v1970 = vpack.c.b16 %v1809, %v1802
  %v1971 = vpack.c.b16 %v1810, %v1803
  %v1972 = vpack.c.b16 %v1811, %v1804
  %v1973 = vpack.c.b16 %v1812, %v1805
  %v1974 = vpack.c.b16 %v1813, %v1806
  %v1975 = vpack.c.b16 %v1814, %v1807
  %v1976 = vpack.c.b16 %v1822, %v1815
  %v1977 = vpack.c.b16 %v1823, %v1816
  %v1978 = vpack.c.b16 %v1824, %v1817
  %v1979 = vpack.c.b16 %v1825, %v1818
  %v1980 = vpack.c.b16 %v1826, %v1819
  %v1981 = vpack.c.b16 %v1827, %v1820
  %v1982 = vpack.c.b16 %v1828, %v1821
  %v1983 = vpack.c.b16 %v1836, %v1829
  %v1984 = vpack.c.b16 %v1837, %v1830
  %v1985 = vpack.c.b16 %v1838, %v1831
  %v1986 = vpack.c.b16 %v1839, %v1832
  %v1987 = vpack.c.b16 %v1840, %v1833
  %v1988 = vpack.c.b16 %v1841, %v1834
  %v1989 = vpack.c.b16 %v1842, %v1835
  %v1990 = vpack.c.b16 %v1850, %v1843
  %v1991 = vpack.c.b16 %v1851, %v1844
  %v1992 = vpack.c.b16 %v1852, %v1845
  %v1993 = vpack.c.b16 %v1853, %v1846
  %v1994 = vpack.c.b16 %v1854, %v1847
  %v1995 = vpack.c.b16 %v1855, %v1848
  %v1996 = vpack.c.b16 %v1856, %v1849
  %v1997 = vpack.c.b16 %v1864, %v1857
  %v1998 = vpack.c.b16 %v1865, %v1858
  %v1999 = vpack.c.b16 %v1866, %v1859
  %v2000 = vpack.c.b16 %v1867, %v1860
  %v2001 = vpack.c.b16 %v1868, %v1861
  %v2002 = vpack.c.b16 %v1869, %v1862
  %v2003 = vpack.c.b16 %v1870, %v1863
  %v2004 = vpack.c.b16 %v1878, %v1871
  %v2005 = vpack.c.b16 %v1879, %v1872
  %v2006 = vpack.c.b16 %v1880, %v1873
  %v2007 = vpack.c.b16 %v1881, %v1874
  %v2008 = vpack.c.b16 %v1882, %v1875
  %v2009 = vpack.c.b16 %v1883, %v1876
  %v2010 = vpack.c.b16 %v1884, %v1877
  %v2011 = vpack.c.b16 %v1892, %v1885
  %v2012 = vpack.c.b16 %v1893, %v1886
  %v2013 = vpack.c.b16 %v1894, %v1887
  %v2014 = vpack.c.b16 %v1895, %v1888
  %v2015 = vpack.c.b16 %v1896, %v1889
  %v2016 = vpack.c.b16 %v1897, %v1890
  %v2017 = vpack.c.b16 %v1898, %v1891
  %v2018 = vpack.c.b16 %v1906, %v1899
  %v2019 = vpack.c.b16 %v1907, %v1900
  %v2020 = vpack.c.b16 %v1908, %v1901
  %v2021 = vpack.c.b16 %v1909, %v1902
  %v2022 = vpack.c.b16 %v1910, %v1903
  %v2023 = vpack.c.b16 %v1911, %v1904
  %v2024 = vpack.c.b16 %v1912, %v1905
  %2137 = vmatprep.subr.bf16.mxu0 %v1963
  %2138 = vmatpush1.bf16.msra.mxu0 %v1962
  %2139 = vmatprep.subr.bf16.mxu0 %v1956
  %2140 = vmatpush1.bf16.msra.mxu0 %v1955
  %2141 = vmatprep.subr.bf16.mxu0 %v1949
  %2142 = vmatpush1.bf16.msra.mxu0 %v1948
  %2143 = vmatprep.subr.bf16.mxu0 %v1942
  %2144 = vmatpush1.bf16.msra.mxu0 %v1941
  %2145 = vmatprep.subr.bf16.mxu0 %v1935
  %2146 = vmatpush1.bf16.msra.mxu0 %v1934
  %2147 = vmatprep.subr.bf16.mxu0 %v1928
  %2148 = vmatpush1.bf16.msra.mxu0 %v1927
  %2149 = vmatprep.subr.bf16.mxu0 %v1921
  %2150 = vmatpush1.bf16.msra.mxu0 %v1920
  %2151 = vmatprep.subr.bf16.mxu0 %v1914
  %2152 = vmatpush1.bf16.msra.mxu0 %v1913
  %2153 = vmatprep.subr.bf16.mxu0 %v2019
  %2154 = vmatpush2.bf16.msra.mxu0 %v2018
  %2155 = vmatprep.subr.bf16.mxu0 %v2012
  %2156 = vmatpush2.bf16.msra.mxu0 %v2011
  %2157 = vmatprep.subr.bf16.mxu0 %v2005
  %2158 = vmatpush2.bf16.msra.mxu0 %v2004
  %2159 = vmatprep.subr.bf16.mxu0 %v1998
  %2160 = vmatpush2.bf16.msra.mxu0 %v1997
  %2161 = vmatprep.subr.bf16.mxu0 %v1991
  %2162 = vmatpush2.bf16.msra.mxu0 %v1990
  %2163 = vmatprep.subr.bf16.mxu0 %v1984
  %2164 = vmatpush2.bf16.msra.mxu0 %v1983
  %2165 = vmatprep.subr.bf16.mxu0 %v1977
  %2166 = vmatpush2.bf16.msra.mxu0 %v1976
  %2167 = vmatprep.subr.bf16.mxu0 %v1970
  %2168 = vmatpush2.bf16.msra.mxu0 %v1969
  %2169 = vmatprep.mubr.bf16.mxu0 %v1395
  %2170 = vmatmul.mubr.bf16.gmra.mxu0 %v1394
  %v2171 = vpop.f32.mrf.mxu0
  %v2172 = vadd.f32 %v1529, %v2171
  %v2173 = vpop.f32.mrf.mxu0
  %v2174 = vadd.f32 %v1533, %v2173
  %v2175 = vpop.f32.mrf.mxu0
  %v2176 = vadd.f32 %v1529, %v2175
  %v2177 = vpop.f32.mrf.mxu0
  %v2178 = vadd.f32 %v1533, %v2177
  %2179 = vdwg.mxu0
  %2180 = vmatprep.subr.bf16.mxu0 %v1965
  %2181 = vmatpush1.bf16.msra.mxu0 %v1964
  %2182 = vmatprep.subr.bf16.mxu0 %v1958
  %2183 = vmatpush1.bf16.msra.mxu0 %v1957
  %2184 = vmatprep.subr.bf16.mxu0 %v1951
  %2185 = vmatpush1.bf16.msra.mxu0 %v1950
  %2186 = vmatprep.subr.bf16.mxu0 %v1944
  %2187 = vmatpush1.bf16.msra.mxu0 %v1943
  %2188 = vmatprep.subr.bf16.mxu0 %v1937
  %2189 = vmatpush1.bf16.msra.mxu0 %v1936
  %2190 = vmatprep.subr.bf16.mxu0 %v1930
  %2191 = vmatpush1.bf16.msra.mxu0 %v1929
  %2192 = vmatprep.subr.bf16.mxu0 %v1923
  %2193 = vmatpush1.bf16.msra.mxu0 %v1922
  %2194 = vmatprep.subr.bf16.mxu0 %v1916
  %2195 = vmatpush1.bf16.msra.mxu0 %v1915
  %2196 = vmatprep.subr.bf16.mxu0 %v2021
  %2197 = vmatpush2.bf16.msra.mxu0 %v2020
  %2198 = vmatprep.subr.bf16.mxu0 %v2014
  %2199 = vmatpush2.bf16.msra.mxu0 %v2013
  %2200 = vmatprep.subr.bf16.mxu0 %v2007
  %2201 = vmatpush2.bf16.msra.mxu0 %v2006
  %2202 = vmatprep.subr.bf16.mxu0 %v2000
  %2203 = vmatpush2.bf16.msra.mxu0 %v1999
  %2204 = vmatprep.subr.bf16.mxu0 %v1993
  %2205 = vmatpush2.bf16.msra.mxu0 %v1992
  %2206 = vmatprep.subr.bf16.mxu0 %v1986
  %2207 = vmatpush2.bf16.msra.mxu0 %v1985
  %2208 = vmatprep.subr.bf16.mxu0 %v1979
  %2209 = vmatpush2.bf16.msra.mxu0 %v1978
  %2210 = vmatprep.subr.bf16.mxu0 %v1972
  %2211 = vmatpush2.bf16.msra.mxu0 %v1971
  %2212 = vmatprep.mubr.bf16.mxu0 %v1395
  %2213 = vmatmul.mubr.bf16.gmra.mxu0 %v1394
  %v2214 = vpop.f32.mrf.mxu0
  %v2215 = vadd.f32 %v1537, %v2214
  %v2216 = vpop.f32.mrf.mxu0
  %v2217 = vadd.f32 %v1541, %v2216
  %v2218 = vpop.f32.mrf.mxu0
  %v2219 = vadd.f32 %v1537, %v2218
  %v2220 = vpop.f32.mrf.mxu0
  %v2221 = vadd.f32 %v1541, %v2220
  %2222 = vdwg.mxu0
  %2223 = vmatprep.subr.bf16.mxu0 %v1967
  %2224 = vmatpush1.bf16.msra.mxu0 %v1966
  %2225 = vmatprep.subr.bf16.mxu0 %v1960
  %2226 = vmatpush1.bf16.msra.mxu0 %v1959
  %2227 = vmatprep.subr.bf16.mxu0 %v1953
  %2228 = vmatpush1.bf16.msra.mxu0 %v1952
  %2229 = vmatprep.subr.bf16.mxu0 %v1946
  %2230 = vmatpush1.bf16.msra.mxu0 %v1945
  %2231 = vmatprep.subr.bf16.mxu0 %v1939
  %2232 = vmatpush1.bf16.msra.mxu0 %v1938
  %2233 = vmatprep.subr.bf16.mxu0 %v1932
  %2234 = vmatpush1.bf16.msra.mxu0 %v1931
  %2235 = vmatprep.subr.bf16.mxu0 %v1925
  %2236 = vmatpush1.bf16.msra.mxu0 %v1924
  %2237 = vmatprep.subr.bf16.mxu0 %v1918
  %2238 = vmatpush1.bf16.msra.mxu0 %v1917
  %2239 = vmatprep.subr.bf16.mxu0 %v2023
  %2240 = vmatpush2.bf16.msra.mxu0 %v2022
  %2241 = vmatprep.subr.bf16.mxu0 %v2016
  %2242 = vmatpush2.bf16.msra.mxu0 %v2015
  %2243 = vmatprep.subr.bf16.mxu0 %v2009
  %2244 = vmatpush2.bf16.msra.mxu0 %v2008
  %2245 = vmatprep.subr.bf16.mxu0 %v2002
  %2246 = vmatpush2.bf16.msra.mxu0 %v2001
  %2247 = vmatprep.subr.bf16.mxu0 %v1995
  %2248 = vmatpush2.bf16.msra.mxu0 %v1994
  %2249 = vmatprep.subr.bf16.mxu0 %v1988
  %2250 = vmatpush2.bf16.msra.mxu0 %v1987
  %2251 = vmatprep.subr.bf16.mxu0 %v1981
  %2252 = vmatpush2.bf16.msra.mxu0 %v1980
  %2253 = vmatprep.subr.bf16.mxu0 %v1974
  %2254 = vmatpush2.bf16.msra.mxu0 %v1973
  %2255 = vmatprep.mubr.bf16.mxu0 %v1395
  %2256 = vmatmul.mubr.bf16.gmra.mxu0 %v1394
  %v2257 = vpop.f32.mrf.mxu0
  %v2258 = vadd.f32 %v1545, %v2257
  %v2259 = vpop.f32.mrf.mxu0
  %v2260 = vadd.f32 %v1549, %v2259
  %v2261 = vpop.f32.mrf.mxu0
  %v2262 = vadd.f32 %v1545, %v2261
  %v2263 = vpop.f32.mrf.mxu0
  %v2264 = vadd.f32 %v1549, %v2263
  %2265 = vdwg.mxu0
  %2266 = vmatprep.subr.bf16.mxu0 0
  %2267 = vmatpush1.bf16.msra.mxu0 %v1968
  %2268 = vmatprep.subr.bf16.mxu0 0
  %2269 = vmatpush1.bf16.msra.mxu0 %v1961
  %2270 = vmatprep.subr.bf16.mxu0 0
  %2271 = vmatpush1.bf16.msra.mxu0 %v1954
  %2272 = vmatprep.subr.bf16.mxu0 0
  %2273 = vmatpush1.bf16.msra.mxu0 %v1947
  %2274 = vmatprep.subr.bf16.mxu0 0
  %2275 = vmatpush1.bf16.msra.mxu0 %v1940
  %2276 = vmatprep.subr.bf16.mxu0 0
  %2277 = vmatpush1.bf16.msra.mxu0 %v1933
  %2278 = vmatprep.subr.bf16.mxu0 0
  %2279 = vmatpush1.bf16.msra.mxu0 %v1926
  %2280 = vmatprep.subr.bf16.mxu0 0
  %2281 = vmatpush1.bf16.msra.mxu0 %v1919
  %2282 = vmatprep.subr.bf16.mxu0 0
  %2283 = vmatpush2.bf16.msra.mxu0 %v2024
  %2284 = vmatprep.subr.bf16.mxu0 0
  %2285 = vmatpush2.bf16.msra.mxu0 %v2017
  %2286 = vmatprep.subr.bf16.mxu0 0
  %2287 = vmatpush2.bf16.msra.mxu0 %v2010
  %2288 = vmatprep.subr.bf16.mxu0 0
  %2289 = vmatpush2.bf16.msra.mxu0 %v2003
  %2290 = vmatprep.subr.bf16.mxu0 0
  %2291 = vmatpush2.bf16.msra.mxu0 %v1996
  %2292 = vmatprep.subr.bf16.mxu0 0
  %2293 = vmatpush2.bf16.msra.mxu0 %v1989
  %2294 = vmatprep.subr.bf16.mxu0 0
  %2295 = vmatpush2.bf16.msra.mxu0 %v1982
  %2296 = vmatprep.subr.bf16.mxu0 0
  %2297 = vmatpush2.bf16.msra.mxu0 %v1975
  %2298 = vmatprep.mubr.bf16.mxu0 %v1395
  %2299 = vmatmul.mubr.bf16.gmra.mxu0 %v1394
  %v2300 = vpop.f32.mrf.mxu0
  %v2301 = vadd.f32 %v1553, %v2300
  %v2302 = vpop.f32.mrf.mxu0
  %v2303 = vpop.f32.mrf.mxu0
  %v2304 = vadd.f32 %v1553, %v2303
  %v2305 = vpop.f32.mrf.mxu0
  %2306 = vdwg.mxu0
  %v2307 = vsub.f32 0.0, %v2172
  %v2308 = vsub.f32 0.0, %v2174
  %v2309 = vsub.f32 0.0, %v2215
  %v2310 = vsub.f32 0.0, %v2217
  %v2311 = vsub.f32 0.0, %v2258
  %v2312 = vsub.f32 0.0, %v2260
  %v2313 = vsub.f32 0.0, %v2301
  %v2314 = vsub.f32 0.0, %v2176
  %v2315 = vsub.f32 0.0, %v2178
  %v2316 = vsub.f32 0.0, %v2219
  %v2317 = vsub.f32 0.0, %v2221
  %v2318 = vsub.f32 0.0, %v2262
  %v2319 = vsub.f32 0.0, %v2264
  %v2320 = vsub.f32 0.0, %v2304
  %v2321 = vmul.f32 %v2307, 1.442695
  %v2322 = vpow.pop %v2321
  %v2323 = vmul.f32 %v2308, 1.442695
  %v2324 = vpow.pop %v2323
  %v2325 = vmul.f32 %v2309, 1.442695
  %v2326 = vpow.pop %v2325
  %v2327 = vmul.f32 %v2310, 1.442695
  %v2328 = vpow.pop %v2327
  %v2329 = vmul.f32 %v2311, 1.442695
  %v2330 = vpow.pop %v2329
  %v2331 = vmul.f32 %v2312, 1.442695
  %v2332 = vpow.pop %v2331
  %v2333 = vmul.f32 %v2313, 1.442695
  %v2334 = vpow.pop %v2333
  %v2335 = vmul.f32 %v2314, 1.442695
  %v2336 = vpow.pop %v2335
  %v2337 = vmul.f32 %v2315, 1.442695
  %v2338 = vpow.pop %v2337
  %v2339 = vmul.f32 %v2316, 1.442695
  %v2340 = vpow.pop %v2339
  %v2341 = vmul.f32 %v2317, 1.442695
  %v2342 = vpow.pop %v2341
  %v2343 = vmul.f32 %v2318, 1.442695
  %v2344 = vpow.pop %v2343
  %v2345 = vmul.f32 %v2319, 1.442695
  %v2346 = vpow.pop %v2345
  %v2347 = vmul.f32 %v2320, 1.442695
  %v2348 = vpow.pop %v2347
  %v2349 = vadd.f32 %v2322, 1.0
  %v2350 = vadd.f32 %v2324, 1.0
  %v2351 = vadd.f32 %v2326, 1.0
  %v2352 = vadd.f32 %v2328, 1.0
  %v2353 = vadd.f32 %v2330, 1.0
  %v2354 = vadd.f32 %v2332, 1.0
  %v2355 = vadd.f32 %v2334, 1.0
  %v2356 = vadd.f32 %v2336, 1.0
  %v2357 = vadd.f32 %v2338, 1.0
  %v2358 = vadd.f32 %v2340, 1.0
  %v2359 = vadd.f32 %v2342, 1.0
  %v2360 = vadd.f32 %v2344, 1.0
  %v2361 = vadd.f32 %v2346, 1.0
  %v2362 = vadd.f32 %v2348, 1.0
  %v2363 = vrcp.pop %v2349
  %v2364 = vrcp.pop %v2350
  %v2365 = vrcp.pop %v2351
  %v2366 = vrcp.pop %v2352
  %v2367 = vrcp.pop %v2353
  %v2368 = vrcp.pop %v2354
  %v2369 = vrcp.pop %v2355
  %v2370 = vrcp.pop %v2356
  %v2371 = vrcp.pop %v2357
  %v2372 = vrcp.pop %v2358
  %v2373 = vrcp.pop %v2359
  %v2374 = vrcp.pop %v2360
  %v2375 = vrcp.pop %v2361
  %v2376 = vrcp.pop %v2362
  %v2377 = vpack.c.bf16 %v2370, %v2363
  %v2378 = vpack.c.bf16 %v2371, %v2364
  %v2379 = vpack.c.bf16 %v2372, %v2365
  %v2380 = vpack.c.bf16 %v2373, %v2366
  %v2381 = vpack.c.bf16 %v2374, %v2367
  %v2382 = vpack.c.bf16 %v2375, %v2368
  %v2383 = vpack.c.bf16 %v2376, %v2369
  %v2391 = vunpack.c.l.b16 %v2377
  %v2392 = vunpack.c.l.b16 %v2378
  %v2393 = vunpack.c.l.b16 %v2379
  %v2394 = vunpack.c.l.b16 %v2380
  %v2395 = vunpack.c.l.b16 %v2381
  %v2396 = vunpack.c.l.b16 %v2382
  %v2397 = vunpack.c.l.b16 %v2383
  %v2398 = vunpack.c.h.b16 %v2377
  %v2399 = vunpack.c.h.b16 %v2378
  %v2400 = vunpack.c.h.b16 %v2379
  %v2401 = vunpack.c.h.b16 %v2380
  %v2402 = vunpack.c.h.b16 %v2381
  %v2403 = vunpack.c.h.b16 %v2382
  %v2404 = vunpack.c.h.b16 %v2383
  %v2405 = vpack.c.b16 %v2392, %v2391
  %v2406 = vpack.c.b16 %v2394, %v2393
  %v2407 = vpack.c.b16 %v2396, %v2395
  %v2408 = vpack.c.b16 %v2397, %v2397
  %v2409 = vpack.c.b16 %v2399, %v2398
  %v2410 = vpack.c.b16 %v2401, %v2400
  %v2411 = vpack.c.b16 %v2403, %v2402
  %v2412 = vpack.c.b16 %v2404, %v2404
  %2421 = vst [vmem:[%s10] sm:$0xff] %v2405
  %2422 = vst [vmem:[%s10 + $0x8] sm:$0xff] %v2406
  %2423 = vst [vmem:[%s10 + $0x10] sm:$0xff] %v2407
  %vm2424 = vcmask 125952
  %2425 = vst.msk [vmem:[%s10 + $0x18] sm:$0xf] %vm2424, %v2408
  %2426 = vst [vmem:[%s10 + $0x1c] sm:$0xff] %v2409
  %2427 = vst [vmem:[%s10 + $0x24] sm:$0xff] %v2410
  %2428 = vst [vmem:[%s10 + $0x2c] sm:$0xff] %v2411
  %2429 = vst.msk [vmem:[%s10 + $0x34] sm:$0xf] %vm2424, %v2412
  // Predicated region
  $region42: #{vae_forward.1} parent=0 // pred_check
    _
  $region43: #{vae_forward.1} parent=0 // pred_check_branch
    %2431 = sbr.rel (0) target = $region45
  $region44: #{vae_forward.1} parent=0 // pred_region
    _
  $region45: #{vae_forward.1} parent=0 // pred_fallthru
    _
  // Predicated region
  $region46: #{vae_forward.1} parent=0 // pred_check
    _
  $region47: #{vae_forward.1} parent=0 // pred_check_branch
    %2433 = sbr.rel (0) target = $region49
  $region48: #{vae_forward.1} parent=0 // pred_region
    _
  $region49: #{vae_forward.1} parent=0 // pred_fallthru
    _
  // Predicated region
  $region50: #{vae_forward.1} parent=0 // pred_check
    _
  $region51: #{vae_forward.1} parent=0 // pred_check_branch
    %2435 = sbr.rel (0) target = $region53
  $region52: #{vae_forward.1} parent=0 // pred_region
    _
  $region53: #{vae_forward.1} parent=0 // pred_fallthru
    _
  // Predicated region
  $region54: #{vae_forward.1} parent=0 // pred_check
    _
  $region55: #{vae_forward.1} parent=0 // pred_check_branch
    %2437 = sbr.rel (0) target = $region57
  $region56: #{vae_forward.1} parent=0 // pred_region
    _
  $region57: #{vae_forward.1} parent=0 // pred_fallthru
    _

</llo_original>
